<compile_context>
chip_gen: v7x
topology: tpu7x:2x2x1
jax: 0.10.0
libtpu: 0.0.40
codegen_flags: <defaults>
</compile_context>

<pallas_src>
import jax
import jax.numpy as jnp
import numpy as np
from jax.experimental import pallas as pl
from jax.experimental.pallas import tpu as pltpu


# ----------------------------------------------------------------------------- kernel
def tdlinear_kernel(xt_ref, xs_ref, q_ref, kt_ref, w_ref, b_ref, out_ref):
    """Fused trend matmul + scaled-dot-product-attention season head.

    One grid step processes a block of Bb batch elements.

      xt_ref : (Bb, L*S)   trend component, natural row-major flattening (l*S + s)
      xs_ref : (Bb, L, S)  seasonal component (attention values)
      q_ref  : (Bb, P, D)  Time2Vec embedding of the P future timestamps
      kt_ref : (Bb, D, L)  Time2Vec embedding of observed timestamps, feature-major
      w_ref  : (L*S, P*S)  block-diagonal trend weight (constant across the grid)
      b_ref  : (1, P*S)    trend bias, flattened row-major (p*S + s)
      out_ref: (Bb, P*S)   prediction, flattened so the store / writeback is dense
    """
    Bb, P, D = q_ref.shape
    S = xs_ref.shape[2]

    # ---- trend: one MXU matmul against the block-diagonal weight (f32 accumulate) ----
    trend = jnp.dot(xt_ref[...], w_ref[...], preferred_element_type=jnp.float32)
    trend = trend + b_ref[...].astype(jnp.float32)                      # (Bb, P*S)

    # ---- season: softmax(Q K^T / sqrt(D)) @ X_season ---------------------------------
    # Native-dtype operands straight to the MXU; f32 accumulation via preferred type.
    q = q_ref[...] * (1.0 / (D ** 0.5))                                 # scale on (P, D)
    # TODO(synk): if bundle dumps show these batched dot_generals unrolling into Bb tiny
    # per-batch vmatmul/vpop pairs (vector-extended slot binding), restructure the
    # attention math (2D-flattened scores / VPU contraction over the depth-8 axis).
    scores = jax.lax.dot_general(
        q, kt_ref[...],
        dimension_numbers=(((2,), (1,)), ((0,), (0,))),
        preferred_element_type=jnp.float32)                             # (Bb, P, L)
    scores = scores - jnp.max(scores, axis=-1, keepdims=True)
    p_un = jnp.exp(scores)
    denom = jnp.sum(p_un, axis=-1, keepdims=True)
    attn = p_un * pl.reciprocal(denom, approx=True)                     # divide -> EUP
    season = jax.lax.dot_general(
        attn.astype(xs_ref.dtype), xs_ref[...],
        dimension_numbers=(((2,), (1,)), ((0,), (0,))),
        preferred_element_type=jnp.float32)                             # (Bb, P, S)

    # ---- fused epilogue: one in-register relayout + one dense store -------------------
    # Fold (Bb, P, S) -> (Bb, P*S) with static middle-axis slices + a single lane concat
    # (no read-modify-write on out_ref, no masked-store chain), accumulate in f32, cast once.
    season_flat = jnp.concatenate([season[:, p, :] for p in range(P)], axis=-1)
    out_ref[...] = (trend + season_flat).astype(out_ref.dtype)


# ----------------------------------------------------------------------------- helpers
def time2vec(tau, params):
    """tau: (..., 1) -> (..., D)   (used for the query embedding)."""
    lin = tau * params["t2v_w0"] + params["t2v_b0"]            # (..., 1)
    per = jnp.sin(tau @ params["t2v_W"] + params["t2v_B"])     # (..., D-1)
    return jnp.concatenate([lin, per], axis=-1)


def time2vec_transposed(tau_row, params):
    """tau_row: (B, 1, L) -> (B, D, L) feature-major Time2Vec embedding.

    Produces the attention keys directly in the (B, D, L) orientation the kernel wants,
    so no full (B, L, D) tensor is materialized and transposed wrapper-side.
    """
    lin = params["t2v_w0"] * tau_row + params["t2v_b0"]                   # (B, 1, L)
    w_col = params["t2v_W"].reshape(-1, 1)                                # (D-1, 1)
    b_col = params["t2v_B"].reshape(1, -1, 1)                             # (1, D-1, 1)
    per = jnp.sin(w_col[None, :, :] * tau_row + b_col)                    # (B, D-1, L)
    return jnp.concatenate([lin, per], axis=1)                            # (B, D, L)


def decompose(X, T, win_length):
    """Causal moving-average decomposition via a single cumsum pass (no stacked copies)."""
    B, N, S = X.shape
    w = win_length
    c = jnp.cumsum(X.astype(jnp.float32), axis=1)                       # (B, N, S)
    upper = c[:, w:, :]                                                 # c[t],      t >= w
    lower = jnp.concatenate(
        [jnp.zeros((B, 1, S), c.dtype), c[:, : N - w - 1, :]], axis=1)  # c[t-w-1], c[-1]=0
    X_trend = ((upper - lower) / (w + 1)).astype(X.dtype)               # (B, N-w, S)
    X_season = X[:, w:, :] - X_trend                                    # (B, N-w, S)
    T_obs = T[:, w:, :]                                                 # (B, N-w, 1)
    return X_trend, X_season, T_obs


def _block_diag_trend_weight(W_t):
    """(S, P, L) -> (L*S, P*S) block-diagonal over the series index.

    Row index l*S + s (matching the natural row-major flattening of X_trend (B, L, S)),
    column index p*S + s'; nonzero only for s == s'.
    NOTE: this is S-times larger than W_t, which is fine for the module's intended small
    num_series (default 1). Once S*L > 128 (extra MXU K passes multiplying zeros) or the
    resident weight approaches the scoped VMEM budget (v7x: 64 MiB physical), switch to a
    per-series batched dot_general (batch over S, contract L) or tile the grid over P.
    """
    S, P, L = W_t.shape
    eye = jnp.eye(S, dtype=W_t.dtype)                       # (S_row, S_col)
    w_lps = jnp.transpose(W_t, (2, 1, 0))                   # (L, P, S)
    w4 = w_lps[:, None, :, :] * eye[None, :, None, :]       # (L, S_row, P, S_col)
    return w4.reshape(L * S, P * S)


def _default_batch_target():
    """MXU-fill target for the batch block: 128 on v5e (4x128x128 MXU), 256 otherwise."""
    try:
        kind = jax.devices()[0].device_kind.lower()
    except Exception:
        return 256
    if "v5e" in kind or "v5 lite" in kind or "v5lite" in kind:
        return 128
    return 256


def _pick_batch_block(B, target):
    """Batch block: multiple of 8 sublanes, up to `target` MXU rows, and (when the batch
    is big enough) capped so the grid keeps >= 2 steps for v7x's two TensorCores."""
    rup8 = lambda x: ((x + 7) // 8) * 8
    if B <= 8:
        return rup8(B)
    return max(8, min(target, rup8(pl.cdiv(B, 2))))


def _pad_batch(a, Bp):
    B = a.shape[0]
    if Bp == B:
        return a
    pad_width = [(0, Bp - B)] + [(0, 0)] * (a.ndim - 1)
    return jnp.pad(a, pad_width)


# ----------------------------------------------------------------------------- glue
def tdlinear_forward(X, T, params, win_length, num_pred_step, batch_block=None):
    B, N, S = X.shape
    L = N - win_length                 # valid steps after moving-average trim
    P = num_pred_step
    D = params["t2v_W"].shape[-1] + 1  # Time2Vec embedding dim

    # Decomposition + Time2Vec embeddings (cheap elementwise; left to XLA).
    X_trend, X_season, T_obs = decompose(X, T, win_length)
    T_next = T[:, -1:, :] + jnp.arange(1, P + 1, dtype=T.dtype)[None, :, None]  # (B, P, 1)
    embed_t_next = time2vec(T_next, params)                         # (B, P, D) queries
    kT = time2vec_transposed(T_obs.reshape(B, 1, L), params)        # (B, D, L) keys, no transpose

    # Transpose-free layout plumbing (all wrapper-side, i.e. free for the kernel):
    xt_flat = X_trend.reshape(B, L * S)                             # natural row-major l*S + s
    w_blk = _block_diag_trend_weight(params["W_t"])                 # (L*S, P*S)
    b_flat = params["b_t"].reshape(1, P * S)                        # row-major p*S + s

    # Batch blocking: pad B UP to a multiple of a large Bb (never shrink to tiny divisors).
    target = batch_block if batch_block is not None else _default_batch_target()
    Bb = _pick_batch_block(B, target)
    Bp = pl.cdiv(B, Bb) * Bb
    xt_pad = _pad_batch(xt_flat, Bp)
    xs_pad = _pad_batch(X_season, Bp)
    q_pad = _pad_batch(embed_t_next, Bp)
    kT_pad = _pad_batch(kT, Bp)
    grid = (Bp // Bb,)

    # VMEM: per-block inputs are a few hundred KB even at Bb=256 double-buffered; the
    # resident block-diag weight is the only thing that could ever grow (see its docstring).
    out_flat = pl.pallas_call(
        tdlinear_kernel,
        out_shape=jax.ShapeDtypeStruct((Bp, P * S), X.dtype),
        grid=grid,
        in_specs=[
            pl.BlockSpec((Bb, L * S), lambda g: (g, 0)),            # X_trend, flattened
            pl.BlockSpec((Bb, L, S), lambda g: (g, 0, 0)),          # X_season (values)
            pl.BlockSpec((Bb, P, D), lambda g: (g, 0, 0)),          # query embeddings
            pl.BlockSpec((Bb, D, L), lambda g: (g, 0, 0)),          # key embeddings (feature-major)
            pl.BlockSpec((L * S, P * S), lambda g: (0, 0)),         # block-diag W_t (shared)
            pl.BlockSpec((1, P * S), lambda g: (0, 0)),             # b_t (shared)
        ],
        out_specs=pl.BlockSpec((Bb, P * S), lambda g: (g, 0)),      # flat output slab
        compiler_params=pltpu.CompilerParams(
            dimension_semantics=("parallel",),                      # shards batch blocks on v7x
            vmem_limit_bytes=32 * 1024 * 1024,
        ),
    )(xt_pad, xs_pad, q_pad, kT_pad, w_blk, b_flat)

    # TODO(synk): self.mid_season / self.mid_season_pred are module-attribute side effects
    # (not part of the returned prediction) and are not reproduced here.
    return out_flat[:B].reshape(B, P, S)


# ----------------------------------------------------------------------------- reference
def tdlinear_reference(X, T, params, win_length, num_pred_step):
    B, N, S = X.shape
    w = win_length
    Np = N - w
    P = num_pred_step

    # Direct (stack-based) moving average for an independent check of the cumsum path.
    windows = jnp.stack([X[:, i:i + Np, :] for i in range(w + 1)], axis=0)
    X_trend = jnp.mean(windows, axis=0)            # (B, Np, S)
    X_season = X[:, w:, :] - X_trend
    T_obs = T[:, w:, :]
    T_next = T[:, -1:, :] + jnp.arange(1, P + 1, dtype=T.dtype)[None, :, None]

    embed_t = time2vec(T_obs, params)
    embed_t_next = time2vec(T_next, params)
    D = embed_t.shape[-1]

    pred_trend = jnp.einsum("spl,bls->bps", params["W_t"], X_trend) + params["b_t"]
    scores = jnp.einsum("bpd,bnd->bpn", embed_t_next, embed_t) / (D ** 0.5)
    attn = jax.nn.softmax(scores, axis=-1)
    pred_season = jnp.einsum("bpn,bns->bps", attn, X_season)
    return pred_trend + pred_season


# ----------------------------------------------------------------------------- main
if __name__ == "__main__":
    B, N, S = 2, 16, 4          # batch, num_step, num_series
    win_length = 4              # moving_avg.win_length
    P = 6                       # num_pred_step
    D = 8                       # time_embed_dim
    L = N - win_length

    key = jax.random.PRNGKey(0)
    k1, k2, k3, k4, k5 = jax.random.split(key, 5)

    X = jax.random.normal(k1, (B, N, S), dtype=jnp.float32)
    T = jnp.broadcast_to(jnp.arange(N, dtype=jnp.float32)[None, :, None], (B, N, 1))

    params = {
        # matches __init__: W_t = ones(num_series, num_pred_step, num_step') / num_step'
        "W_t": jnp.ones((S, P, L), jnp.float32) / L,
        "b_t": jnp.zeros((P, S), jnp.float32),
        # Time2Vec parameters (deterministic synthetic init)
        "t2v_w0": jax.random.normal(k2, (), jnp.float32) * 0.1,
        "t2v_b0": jax.random.normal(k3, (), jnp.float32) * 0.1,
        "t2v_W": jax.random.normal(k4, (1, D - 1), jnp.float32) * 0.1,
        "t2v_B": jax.random.normal(k5, (D - 1,), jnp.float32) * 0.1,
    }

    out = tdlinear_forward(X, T, params, win_length, P)
    out = jax.block_until_ready(out)

    ref = tdlinear_reference(X, T, params, win_length, P)
    assert out.shape == (B, P, S), out.shape
    np.testing.assert_allclose(np.asarray(out), np.asarray(ref), rtol=2e-2, atol=2e-2)
    print("KERNEL_OK")
</pallas_src>

<mosaic_0001>
module attributes {stable_mosaic.version = 11 : i64} {
  func.func @tdlinear_kernel(%arg0: i32, %arg1: memref<8x48xf32, #tpu.memory_space<vmem>>, %arg2: memref<8x12x4xf32, #tpu.memory_space<vmem>>, %arg3: memref<8x6x8xf32, #tpu.memory_space<vmem>>, %arg4: memref<8x8x12xf32, #tpu.memory_space<vmem>>, %arg5: memref<48x24xf32, #tpu.memory_space<vmem>>, %arg6: memref<1x24xf32, #tpu.memory_space<vmem>>, %arg7: memref<8x24xf32, #tpu.memory_space<vmem>>) attributes {dimension_semantics = [#tpu.dimension_semantics<parallel>], iteration_bounds = array<i64: 1>, scalar_prefetch = 0 : i64, scratch_operands = 0 : i64, tpu.core_type = #tpu.core_type<tc>, window_params = [{transform_indices = @transform_0, window_bounds = array<i64: 8, 48>}, {transform_indices = @transform_1, window_bounds = array<i64: 8, 12, 4>}, {transform_indices = @transform_2, window_bounds = array<i64: 8, 6, 8>}, {transform_indices = @transform_3, window_bounds = array<i64: 8, 8, 12>}, {pipeline_mode = #tpu.pipeline_mode<synchronous>, transform_indices = @transform_4, window_bounds = array<i64: 48, 24>}, {pipeline_mode = #tpu.pipeline_mode<synchronous>, transform_indices = @transform_5, window_bounds = array<i64: 1, 24>}, {transform_indices = @transform_6, window_bounds = array<i64: 8, 24>}]} {
    %c0 = arith.constant 0 : index
    %c0_0 = arith.constant 0 : index
    %0 = vector.load %arg1[%c0, %c0_0] : memref<8x48xf32, #tpu.memory_space<vmem>>, vector<8x48xf32>
    %c0_1 = arith.constant 0 : index
    %c0_2 = arith.constant 0 : index
    %1 = vector.load %arg5[%c0_1, %c0_2] : memref<48x24xf32, #tpu.memory_space<vmem>>, vector<48x24xf32>
    %cst = arith.constant dense<0.000000e+00> : vector<8x24xf32>
    %2 = tpu.matmul %0, %1, %cst {dimension_numbers = #tpu.dot_dimension_numbers<[1], [0], [0], [1], [0, 0, 1, 1], [], []>} : vector<8x48xf32>, vector<48x24xf32>, vector<8x24xf32> -> vector<8x24xf32>
    %c0_3 = arith.constant 0 : index
    %c0_4 = arith.constant 0 : index
    %3 = vector.load %arg6[%c0_3, %c0_4] : memref<1x24xf32, #tpu.memory_space<vmem>>, vector<1x24xf32>
    %4 = vector.broadcast %3 : vector<1x24xf32> to vector<8x24xf32>
    %5 = arith.addf %2, %4 : vector<8x24xf32>
    %c0_5 = arith.constant 0 : index
    %c0_6 = arith.constant 0 : index
    %c0_7 = arith.constant 0 : index
    %6 = vector.load %arg3[%c0_5, %c0_6, %c0_7] : memref<8x6x8xf32, #tpu.memory_space<vmem>>, vector<8x6x8xf32>
    %cst_8 = arith.constant 0.353553385 : f32
    %7 = vector.broadcast %cst_8 : f32 to vector<8x6x8xf32>
    %8 = arith.mulf %6, %7 : vector<8x6x8xf32>
    %c0_9 = arith.constant 0 : index
    %c0_10 = arith.constant 0 : index
    %c0_11 = arith.constant 0 : index
    %9 = vector.load %arg4[%c0_9, %c0_10, %c0_11] : memref<8x8x12xf32, #tpu.memory_space<vmem>>, vector<8x8x12xf32>
    %cst_12 = arith.constant dense<0.000000e+00> : vector<8x6x12xf32>
    %10 = tpu.matmul %8, %9, %cst_12 {dimension_numbers = #tpu.dot_dimension_numbers<[2], [1], [1], [2], [0, 0, 0, 1, 1, 2], [0], [0]>} : vector<8x6x8xf32>, vector<8x8x12xf32>, vector<8x6x12xf32> -> vector<8x6x12xf32>
    %cst_13 = arith.constant dense<0xFF800000> : vector<8x6xf32>
    %11 = vector.multi_reduction <maximumf>, %10, %cst_13 [2] : vector<8x6x12xf32> to vector<8x6xf32>
    %12 = vector.shape_cast %11 : vector<8x6xf32> to vector<8x6x1xf32>
    %13 = vector.broadcast %12 : vector<8x6x1xf32> to vector<8x6x12xf32>
    %14 = arith.subf %10, %13 : vector<8x6x12xf32>
    %15 = math.exp %14 : vector<8x6x12xf32>
    %cst_14 = arith.constant dense<0.000000e+00> : vector<8x6xf32>
    %16 = vector.multi_reduction <add>, %15, %cst_14 [2] : vector<8x6x12xf32> to vector<8x6xf32>
    %17 = vector.shape_cast %16 : vector<8x6xf32> to vector<8x6x1xf32>
    %18 = tpu.reciprocal %17 {approx = true} : vector<8x6x1xf32> -> vector<8x6x1xf32>
    %19 = vector.broadcast %18 : vector<8x6x1xf32> to vector<8x6x12xf32>
    %20 = arith.mulf %15, %19 : vector<8x6x12xf32>
    %c0_15 = arith.constant 0 : index
    %c0_16 = arith.constant 0 : index
    %c0_17 = arith.constant 0 : index
    %21 = vector.load %arg2[%c0_15, %c0_16, %c0_17] : memref<8x12x4xf32, #tpu.memory_space<vmem>>, vector<8x12x4xf32>
    %cst_18 = arith.constant dense<0.000000e+00> : vector<8x6x4xf32>
    %22 = tpu.matmul %20, %21, %cst_18 {dimension_numbers = #tpu.dot_dimension_numbers<[2], [1], [1], [2], [0, 0, 0, 1, 1, 2], [0], [0]>} : vector<8x6x12xf32>, vector<8x12x4xf32>, vector<8x6x4xf32> -> vector<8x6x4xf32>
    %23 = vector.extract_strided_slice %22 {offsets = [0, 0, 0], sizes = [8, 1, 4], strides = [1, 1, 1]} : vector<8x6x4xf32> to vector<8x1x4xf32>
    %24 = vector.shape_cast %23 : vector<8x1x4xf32> to vector<8x4xf32>
    %25 = vector.extract_strided_slice %22 {offsets = [0, 1, 0], sizes = [8, 1, 4], strides = [1, 1, 1]} : vector<8x6x4xf32> to vector<8x1x4xf32>
    %26 = vector.shape_cast %25 : vector<8x1x4xf32> to vector<8x4xf32>
    %27 = vector.extract_strided_slice %22 {offsets = [0, 2, 0], sizes = [8, 1, 4], strides = [1, 1, 1]} : vector<8x6x4xf32> to vector<8x1x4xf32>
    %28 = vector.shape_cast %27 : vector<8x1x4xf32> to vector<8x4xf32>
    %29 = vector.extract_strided_slice %22 {offsets = [0, 3, 0], sizes = [8, 1, 4], strides = [1, 1, 1]} : vector<8x6x4xf32> to vector<8x1x4xf32>
    %30 = vector.shape_cast %29 : vector<8x1x4xf32> to vector<8x4xf32>
    %31 = vector.extract_strided_slice %22 {offsets = [0, 4, 0], sizes = [8, 1, 4], strides = [1, 1, 1]} : vector<8x6x4xf32> to vector<8x1x4xf32>
    %32 = vector.shape_cast %31 : vector<8x1x4xf32> to vector<8x4xf32>
    %33 = vector.extract_strided_slice %22 {offsets = [0, 5, 0], sizes = [8, 1, 4], strides = [1, 1, 1]} : vector<8x6x4xf32> to vector<8x1x4xf32>
    %34 = vector.shape_cast %33 : vector<8x1x4xf32> to vector<8x4xf32>
    %35 = tpu.concatenate %24, %26, %28, %30, %32, %34 in 1 : vector<8x4xf32>, vector<8x4xf32>, vector<8x4xf32>, vector<8x4xf32>, vector<8x4xf32>, vector<8x4xf32> -> vector<8x24xf32>
    %36 = arith.addf %5, %35 : vector<8x24xf32>
    %c0_19 = arith.constant 0 : index
    %c0_20 = arith.constant 0 : index
    %37 = vector.load %arg7[%c0_19, %c0_20] : memref<8x24xf32, #tpu.memory_space<vmem>>, vector<8x24xf32>
    tpu.vector_store %arg7[%c0_19, %c0_20], %36 {strides = array<i32>} : memref<8x24xf32, #tpu.memory_space<vmem>>, vector<8x24xf32>,
    return
  }
  func.func @transform_0(%arg0: i32) -> (i32, i32) {
    %c0_i32 = arith.constant 0 : i32
    %c0_i32_0 = arith.constant 0 : i32
    return %arg0, %c0_i32 : i32, i32
  }
  func.func @transform_1(%arg0: i32) -> (i32, i32, i32) {
    %c0_i32 = arith.constant 0 : i32
    %c0_i32_0 = arith.constant 0 : i32
    %c0_i32_1 = arith.constant 0 : i32
    return %arg0, %c0_i32, %c0_i32_0 : i32, i32, i32
  }
  func.func @transform_2(%arg0: i32) -> (i32, i32, i32) {
    %c0_i32 = arith.constant 0 : i32
    %c0_i32_0 = arith.constant 0 : i32
    %c0_i32_1 = arith.constant 0 : i32
    return %arg0, %c0_i32, %c0_i32_0 : i32, i32, i32
  }
  func.func @transform_3(%arg0: i32) -> (i32, i32, i32) {
    %c0_i32 = arith.constant 0 : i32
    %c0_i32_0 = arith.constant 0 : i32
    %c0_i32_1 = arith.constant 0 : i32
    return %arg0, %c0_i32, %c0_i32_0 : i32, i32, i32
  }
  func.func @transform_4(%arg0: i32) -> (i32, i32) {
    %c0_i32 = arith.constant 0 : i32
    %c0_i32_0 = arith.constant 0 : i32
    %c0_i32_1 = arith.constant 0 : i32
    return %c0_i32, %c0_i32_0 : i32, i32
  }
  func.func @transform_5(%arg0: i32) -> (i32, i32) {
    %c0_i32 = arith.constant 0 : i32
    %c0_i32_0 = arith.constant 0 : i32
    %c0_i32_1 = arith.constant 0 : i32
    return %c0_i32, %c0_i32_0 : i32, i32
  }
  func.func @transform_6(%arg0: i32) -> (i32, i32) {
    %c0_i32 = arith.constant 0 : i32
    %c0_i32_0 = arith.constant 0 : i32
    return %arg0, %c0_i32 : i32, i32
  }
}

</mosaic_0001>

<llo_original>
// kernel: tpu_custom_call.1
$region0: #{tpu_custom_call.1}
  #allocation0 [shape = 'u32[]', space=smem, size = 0x4, offset = 0x4, fixed_abs, tag = 'smem constant byte address 0x4 - core index']
  #allocation1 [shape = 'u32[144,128]{1,0:T(1,128)}', space=vmem, size = 0x12000, scoped, tag = 'internal scratch']
  %s0 = inlined_call_operand.vmem [shape: f32[8,48], index: 0, kind: input, shape index: {}]
  %s1 = inlined_call_operand.vmem [shape: f32[8,12,4], index: 1, kind: input, shape index: {}]
  %s2 = inlined_call_operand.vmem [shape: f32[8,6,8], index: 2, kind: input, shape index: {}]
  %s3 = inlined_call_operand.vmem [shape: f32[8,8,12], index: 3, kind: input, shape index: {}]
  %s4 = inlined_call_operand.vmem [shape: f32[48,24], index: 4, kind: input, shape index: {}]
  %s5 = inlined_call_operand.vmem [shape: f32[1,24], index: 5, kind: input, shape index: {}]
  %s6 = inlined_call_operand.hbm [shape: f32[8,24], index: 6, kind: output, shape index: {}]
  %s7 = sld [smem:[#allocation0]]
  $region34: #{tpu_custom_call.1} parent=0
    _
  %s9 = ssub.s32 1, %s7
  %s10 = scalar_select 0, %s9, %s7
  $region1: #{tpu_custom_call.1} parent=0
    #allocation2 [shape = 'u8[4096]{0}', space=vmem, size = 0x1000, scoped, tag = 'output window, operand 0, single buffered']
    #allocation3 [shape = 's32[1]{0}', space=sflag, size = 0x4, scoped, tag = 'scoped memory for tpu_custom_call.1']
    %11 = vsyncpa [#allocation3], 0
    // Predicated region
    $region2: #{tpu_custom_call.1} parent=1 // pred_check
      _
    $region3: #{tpu_custom_call.1} parent=1 // pred_check_branch
      %13 = sbr.rel (0) target = $region5
    $region4: #{tpu_custom_call.1} parent=1 // pred_region
      _
    $region5: #{tpu_custom_call.1} parent=1 // pred_fallthru
      _
    // Predicated region
    $region6: #{tpu_custom_call.1} parent=1 // pred_check
      _
    $region7: #{tpu_custom_call.1} parent=1 // pred_check_branch
      %15 = sbr.rel (0) target = $region9
    $region8: #{tpu_custom_call.1} parent=1 // pred_region
      _
    $region9: #{tpu_custom_call.1} parent=1 // pred_fallthru
      _
    // Predicated region
    $region10: #{tpu_custom_call.1} parent=1 // pred_check
      _
    $region11: #{tpu_custom_call.1} parent=1 // pred_check_branch
      %17 = sbr.rel (0) target = $region13
    $region12: #{tpu_custom_call.1} parent=1 // pred_region
      _
    $region13: #{tpu_custom_call.1} parent=1 // pred_fallthru
      _
    // Predicated region
    $region14: #{tpu_custom_call.1} parent=1 // pred_check
      _
    $region15: #{tpu_custom_call.1} parent=1 // pred_check_branch
      %19 = sbr.rel (0) target = $region17
    $region16: #{tpu_custom_call.1} parent=1 // pred_region
      _
    $region17: #{tpu_custom_call.1} parent=1 // pred_fallthru
      _
    // Predicated region
    $region18: #{tpu_custom_call.1} parent=1 // pred_check
      _
    $region19: #{tpu_custom_call.1} parent=1 // pred_check_branch
      %21 = sbr.rel (0) target = $region21
    $region20: #{tpu_custom_call.1} parent=1 // pred_region
      _
    $region21: #{tpu_custom_call.1} parent=1 // pred_fallthru
      _
    // Predicated region
    $region22: #{tpu_custom_call.1} parent=1 // pred_check
      _
    $region23: #{tpu_custom_call.1} parent=1 // pred_check_branch
      %23 = sbr.rel (0) target = $region25
    $region24: #{tpu_custom_call.1} parent=1 // pred_region
      _
    $region25: #{tpu_custom_call.1} parent=1 // pred_fallthru
      _
    %v24 = vld [vmem:[%s0] sm:$0xff]
    %v25 = vld [vmem:[%s4] sm:$0xff]
    %v26 = vld [vmem:[%s4 + $0x8] sm:$0xff]
    %v27 = vld [vmem:[%s4 + $0x10] sm:$0xff]
    %v28 = vld [vmem:[%s4 + $0x18] sm:$0xff]
    %v29 = vld [vmem:[%s4 + $0x20] sm:$0xff]
    %v30 = vld [vmem:[%s4 + $0x28] sm:$0xff]
    %v31 = vld [vmem:[%s5] sm:$0x1]
    %v33 = vlaneseq
    %v34 = vshrl.u32 %v33, 7
    %v35 = vsub.s32 0, %v34
    %v36 = vrot.slane %v31, %v35
    %vm38 = vcmask 392192
    %v40 = vsel %vm38, %v24, 0
    %42 = vmatprep.subr.mxu0 0.0
    %43 = vmatpush1.msra.mxu0 %v25
    %44 = vmatprep.subr.mxu0 0.0
    %45 = vmatpush1.msra.mxu0 %v26
    %46 = vmatprep.subr.mxu0 0.0
    %47 = vmatpush1.msra.mxu0 %v27
    %48 = vmatprep.subr.mxu0 0.0
    %49 = vmatpush1.msra.mxu0 %v28
    %50 = vmatprep.subr.mxu0 0.0
    %51 = vmatpush1.msra.mxu0 %v29
    %52 = vmatprep.subr.mxu0 0.0
    %53 = vmatpush1.msra.mxu0 %v30
    %54 = vmatprep.subr.mxu0 0.0
    %55 = vmatpush1.msra.mxu0 0.0
    %56 = vmatprep.subr.mxu0 0.0
    %57 = vmatpush1.msra.mxu0 0.0
    %58 = vmatprep.subr.mxu0 0.0
    %59 = vmatpush1.msra.mxu0 0.0
    %60 = vmatprep.subr.mxu0 0.0
    %61 = vmatpush1.msra.mxu0 0.0
    %62 = vmatprep.subr.mxu0 0.0
    %63 = vmatpush1.msra.mxu0 0.0
    %64 = vmatprep.subr.mxu0 0.0
    %65 = vmatpush1.msra.mxu0 0.0
    %66 = vmatprep.subr.mxu0 0.0
    %67 = vmatpush1.msra.mxu0 0.0
    %68 = vmatprep.subr.mxu0 0.0
    %69 = vmatpush1.msra.mxu0 0.0
    %70 = vmatprep.subr.mxu0 0.0
    %71 = vmatpush1.msra.mxu0 0.0
    %72 = vmatprep.subr.mxu0 0.0
    %73 = vmatpush1.msra.mxu0 0.0
    %74 = vmatprep.subr.mxu0 0.0
    %75 = vmatpush1.msra.mxu0 0.0
    %76 = vmatprep.subr.mxu0 0.0
    %77 = vmatpush1.msra.mxu0 0.0
    %78 = vmatprep.subr.mxu0 0.0
    %79 = vmatpush1.msra.mxu0 0.0
    %80 = vmatprep.subr.mxu0 0.0
    %81 = vmatpush1.msra.mxu0 0.0
    %82 = vmatprep.subr.mxu0 0.0
    %83 = vmatpush1.msra.mxu0 0.0
    %84 = vmatprep.subr.mxu0 0.0
    %85 = vmatpush1.msra.mxu0 0.0
    %86 = vmatprep.subr.mxu0 0.0
    %87 = vmatpush1.msra.mxu0 0.0
    %88 = vmatprep.subr.mxu0 0.0
    %89 = vmatpush1.msra.mxu0 0.0
    %90 = vmatprep.subr.mxu0 0.0
    %91 = vmatpush1.msra.mxu0 0.0
    %92 = vmatprep.subr.mxu0 0.0
    %93 = vmatpush1.msra.mxu0 0.0
    %94 = vmatprep.subr.mxu0 0.0
    %95 = vmatpush1.msra.mxu0 0.0
    %96 = vmatprep.subr.mxu0 0.0
    %97 = vmatpush1.msra.mxu0 0.0
    %98 = vmatprep.subr.mxu0 0.0
    %99 = vmatpush1.msra.mxu0 0.0
    %100 = vmatprep.subr.mxu0 0.0
    %101 = vmatpush1.msra.mxu0 0.0
    %102 = vmatprep.subr.mxu0 0.0
    %103 = vmatpush1.msra.mxu0 0.0
    %104 = vmatprep.subr.mxu0 0.0
    %105 = vmatpush1.msra.mxu0 0.0
    %106 = vmatprep.mubr.f32.mxu0 0.0
    %107 = vmatmul.mubr.f32.gmra.mrb[0].mxu0 %v40
    %v108 = vpop.f32.mrb[0].mxu0
    %v109 = vadd.f32 %v36, %v108
    %v110 = vpop.f32.mrb[0].mxu0
    %111 = vdwg.mxu0
    %v112 = vld [vmem:[%s2] sm:$0x3f]
    %v113 = vld [vmem:[%s2 + $0x8] sm:$0x3f]
    %v114 = vld [vmem:[%s2 + $0x10] sm:$0x3f]
    %v115 = vld [vmem:[%s2 + $0x18] sm:$0x3f]
    %v116 = vld [vmem:[%s2 + $0x20] sm:$0x3f]
    %v117 = vld [vmem:[%s2 + $0x28] sm:$0x3f]
    %v118 = vld [vmem:[%s2 + $0x30] sm:$0x3f]
    %v119 = vld [vmem:[%s2 + $0x38] sm:$0x3f]
    %v120 = vmul.f32 %v112, 0.35355338
    %v121 = vmul.f32 %v113, 0.35355338
    %v122 = vmul.f32 %v114, 0.35355338
    %v123 = vmul.f32 %v115, 0.35355338
    %v124 = vmul.f32 %v116, 0.35355338
    %v125 = vmul.f32 %v117, 0.35355338
    %v126 = vmul.f32 %v118, 0.35355338
    %v127 = vmul.f32 %v119, 0.35355338
    %v128 = vld [vmem:[%s3] sm:$0xff]
    %v129 = vld [vmem:[%s3 + $0x8] sm:$0xff]
    %v130 = vld [vmem:[%s3 + $0x10] sm:$0xff]
    %v131 = vld [vmem:[%s3 + $0x18] sm:$0xff]
    %v132 = vld [vmem:[%s3 + $0x20] sm:$0xff]
    %v133 = vld [vmem:[%s3 + $0x28] sm:$0xff]
    %v134 = vld [vmem:[%s3 + $0x30] sm:$0xff]
    %v135 = vld [vmem:[%s3 + $0x38] sm:$0xff]
    %vm136 = vcmask 64512
    %v138 = vsel %vm136, %v120, 0
    %140 = vmatprep.subr.mxu0 0.0
    %141 = vmatpush1.msra.mxu0 %v128
    %142 = vmatprep.subr.mxu0 0.0
    %143 = vmatpush1.msra.mxu0 0.0
    %144 = vmatprep.subr.mxu0 0.0
    %145 = vmatpush1.msra.mxu0 0.0
    %146 = vmatprep.subr.mxu0 0.0
    %147 = vmatpush1.msra.mxu0 0.0
    %148 = vmatprep.subr.mxu0 0.0
    %149 = vmatpush1.msra.mxu0 0.0
    %150 = vmatprep.subr.mxu0 0.0
    %151 = vmatpush1.msra.mxu0 0.0
    %152 = vmatprep.subr.mxu0 0.0
    %153 = vmatpush1.msra.mxu0 0.0
    %154 = vmatprep.subr.mxu0 0.0
    %155 = vmatpush1.msra.mxu0 0.0
    %156 = vmatprep.subr.mxu0 0.0
    %157 = vmatpush1.msra.mxu0 0.0
    %158 = vmatprep.subr.mxu0 0.0
    %159 = vmatpush1.msra.mxu0 0.0
    %160 = vmatprep.subr.mxu0 0.0
    %161 = vmatpush1.msra.mxu0 0.0
    %162 = vmatprep.subr.mxu0 0.0
    %163 = vmatpush1.msra.mxu0 0.0
    %164 = vmatprep.subr.mxu0 0.0
    %165 = vmatpush1.msra.mxu0 0.0
    %166 = vmatprep.subr.mxu0 0.0
    %167 = vmatpush1.msra.mxu0 0.0
    %168 = vmatprep.subr.mxu0 0.0
    %169 = vmatpush1.msra.mxu0 0.0
    %170 = vmatprep.subr.mxu0 0.0
    %171 = vmatpush1.msra.mxu0 0.0
    %172 = vmatprep.subr.mxu0 0.0
    %173 = vmatpush1.msra.mxu0 0.0
    %174 = vmatprep.subr.mxu0 0.0
    %175 = vmatpush1.msra.mxu0 0.0
    %176 = vmatprep.subr.mxu0 0.0
    %177 = vmatpush1.msra.mxu0 0.0
    %178 = vmatprep.subr.mxu0 0.0
    %179 = vmatpush1.msra.mxu0 0.0
    %180 = vmatprep.subr.mxu0 0.0
    %181 = vmatpush1.msra.mxu0 0.0
    %182 = vmatprep.subr.mxu0 0.0
    %183 = vmatpush1.msra.mxu0 0.0
    %184 = vmatprep.subr.mxu0 0.0
    %185 = vmatpush1.msra.mxu0 0.0
    %186 = vmatprep.subr.mxu0 0.0
    %187 = vmatpush1.msra.mxu0 0.0
    %188 = vmatprep.subr.mxu0 0.0
    %189 = vmatpush1.msra.mxu0 0.0
    %190 = vmatprep.subr.mxu0 0.0
    %191 = vmatpush1.msra.mxu0 0.0
    %192 = vmatprep.subr.mxu0 0.0
    %193 = vmatpush1.msra.mxu0 0.0
    %194 = vmatprep.subr.mxu0 0.0
    %195 = vmatpush1.msra.mxu0 0.0
    %196 = vmatprep.subr.mxu0 0.0
    %197 = vmatpush1.msra.mxu0 0.0
    %198 = vmatprep.subr.mxu0 0.0
    %199 = vmatpush1.msra.mxu0 0.0
    %200 = vmatprep.subr.mxu0 0.0
    %201 = vmatpush1.msra.mxu0 0.0
    %202 = vmatprep.subr.mxu0 0.0
    %203 = vmatpush1.msra.mxu0 0.0
    %204 = vmatprep.mubr.f32.mxu0 0.0
    %205 = vmatmul.mubr.f32.gmra.mrb[0].mxu0 %v138
    %v206 = vpop.f32.mrb[0].mxu0
    %v207 = vadd.f32 0.0, %v206
    %v208 = vpop.f32.mrb[0].mxu0
    %209 = vdwg.mxu0
    %v211 = vsel %vm136, %v121, 0
    %213 = vmatprep.subr.mxu0 0.0
    %214 = vmatpush1.msra.mxu0 %v129
    %215 = vmatprep.subr.mxu0 0.0
    %216 = vmatpush1.msra.mxu0 0.0
    %217 = vmatprep.subr.mxu0 0.0
    %218 = vmatpush1.msra.mxu0 0.0
    %219 = vmatprep.subr.mxu0 0.0
    %220 = vmatpush1.msra.mxu0 0.0
    %221 = vmatprep.subr.mxu0 0.0
    %222 = vmatpush1.msra.mxu0 0.0
    %223 = vmatprep.subr.mxu0 0.0
    %224 = vmatpush1.msra.mxu0 0.0
    %225 = vmatprep.subr.mxu0 0.0
    %226 = vmatpush1.msra.mxu0 0.0
    %227 = vmatprep.subr.mxu0 0.0
    %228 = vmatpush1.msra.mxu0 0.0
    %229 = vmatprep.subr.mxu0 0.0
    %230 = vmatpush1.msra.mxu0 0.0
    %231 = vmatprep.subr.mxu0 0.0
    %232 = vmatpush1.msra.mxu0 0.0
    %233 = vmatprep.subr.mxu0 0.0
    %234 = vmatpush1.msra.mxu0 0.0
    %235 = vmatprep.subr.mxu0 0.0
    %236 = vmatpush1.msra.mxu0 0.0
    %237 = vmatprep.subr.mxu0 0.0
    %238 = vmatpush1.msra.mxu0 0.0
    %239 = vmatprep.subr.mxu0 0.0
    %240 = vmatpush1.msra.mxu0 0.0
    %241 = vmatprep.subr.mxu0 0.0
    %242 = vmatpush1.msra.mxu0 0.0
    %243 = vmatprep.subr.mxu0 0.0
    %244 = vmatpush1.msra.mxu0 0.0
    %245 = vmatprep.subr.mxu0 0.0
    %246 = vmatpush1.msra.mxu0 0.0
    %247 = vmatprep.subr.mxu0 0.0
    %248 = vmatpush1.msra.mxu0 0.0
    %249 = vmatprep.subr.mxu0 0.0
    %250 = vmatpush1.msra.mxu0 0.0
    %251 = vmatprep.subr.mxu0 0.0
    %252 = vmatpush1.msra.mxu0 0.0
    %253 = vmatprep.subr.mxu0 0.0
    %254 = vmatpush1.msra.mxu0 0.0
    %255 = vmatprep.subr.mxu0 0.0
    %256 = vmatpush1.msra.mxu0 0.0
    %257 = vmatprep.subr.mxu0 0.0
    %258 = vmatpush1.msra.mxu0 0.0
    %259 = vmatprep.subr.mxu0 0.0
    %260 = vmatpush1.msra.mxu0 0.0
    %261 = vmatprep.subr.mxu0 0.0
    %262 = vmatpush1.msra.mxu0 0.0
    %263 = vmatprep.subr.mxu0 0.0
    %264 = vmatpush1.msra.mxu0 0.0
    %265 = vmatprep.subr.mxu0 0.0
    %266 = vmatpush1.msra.mxu0 0.0
    %267 = vmatprep.subr.mxu0 0.0
    %268 = vmatpush1.msra.mxu0 0.0
    %269 = vmatprep.subr.mxu0 0.0
    %270 = vmatpush1.msra.mxu0 0.0
    %271 = vmatprep.subr.mxu0 0.0
    %272 = vmatpush1.msra.mxu0 0.0
    %273 = vmatprep.subr.mxu0 0.0
    %274 = vmatpush1.msra.mxu0 0.0
    %275 = vmatprep.subr.mxu0 0.0
    %276 = vmatpush1.msra.mxu0 0.0
    %277 = vmatprep.mubr.f32.mxu0 0.0
    %278 = vmatmul.mubr.f32.gmra.mrb[0].mxu0 %v211
    %v279 = vpop.f32.mrb[0].mxu0
    %v280 = vadd.f32 0.0, %v279
    %v281 = vpop.f32.mrb[0].mxu0
    %282 = vdwg.mxu0
    %v284 = vsel %vm136, %v122, 0
    %286 = vmatprep.subr.mxu0 0.0
    %287 = vmatpush1.msra.mxu0 %v130
    %288 = vmatprep.subr.mxu0 0.0
    %289 = vmatpush1.msra.mxu0 0.0
    %290 = vmatprep.subr.mxu0 0.0
    %291 = vmatpush1.msra.mxu0 0.0
    %292 = vmatprep.subr.mxu0 0.0
    %293 = vmatpush1.msra.mxu0 0.0
    %294 = vmatprep.subr.mxu0 0.0
    %295 = vmatpush1.msra.mxu0 0.0
    %296 = vmatprep.subr.mxu0 0.0
    %297 = vmatpush1.msra.mxu0 0.0
    %298 = vmatprep.subr.mxu0 0.0
    %299 = vmatpush1.msra.mxu0 0.0
    %300 = vmatprep.subr.mxu0 0.0
    %301 = vmatpush1.msra.mxu0 0.0
    %302 = vmatprep.subr.mxu0 0.0
    %303 = vmatpush1.msra.mxu0 0.0
    %304 = vmatprep.subr.mxu0 0.0
    %305 = vmatpush1.msra.mxu0 0.0
    %306 = vmatprep.subr.mxu0 0.0
    %307 = vmatpush1.msra.mxu0 0.0
    %308 = vmatprep.subr.mxu0 0.0
    %309 = vmatpush1.msra.mxu0 0.0
    %310 = vmatprep.subr.mxu0 0.0
    %311 = vmatpush1.msra.mxu0 0.0
    %312 = vmatprep.subr.mxu0 0.0
    %313 = vmatpush1.msra.mxu0 0.0
    %314 = vmatprep.subr.mxu0 0.0
    %315 = vmatpush1.msra.mxu0 0.0
    %316 = vmatprep.subr.mxu0 0.0
    %317 = vmatpush1.msra.mxu0 0.0
    %318 = vmatprep.subr.mxu0 0.0
    %319 = vmatpush1.msra.mxu0 0.0
    %320 = vmatprep.subr.mxu0 0.0
    %321 = vmatpush1.msra.mxu0 0.0
    %322 = vmatprep.subr.mxu0 0.0
    %323 = vmatpush1.msra.mxu0 0.0
    %324 = vmatprep.subr.mxu0 0.0
    %325 = vmatpush1.msra.mxu0 0.0
    %326 = vmatprep.subr.mxu0 0.0
    %327 = vmatpush1.msra.mxu0 0.0
    %328 = vmatprep.subr.mxu0 0.0
    %329 = vmatpush1.msra.mxu0 0.0
    %330 = vmatprep.subr.mxu0 0.0
    %331 = vmatpush1.msra.mxu0 0.0
    %332 = vmatprep.subr.mxu0 0.0
    %333 = vmatpush1.msra.mxu0 0.0
    %334 = vmatprep.subr.mxu0 0.0
    %335 = vmatpush1.msra.mxu0 0.0
    %336 = vmatprep.subr.mxu0 0.0
    %337 = vmatpush1.msra.mxu0 0.0
    %338 = vmatprep.subr.mxu0 0.0
    %339 = vmatpush1.msra.mxu0 0.0
    %340 = vmatprep.subr.mxu0 0.0
    %341 = vmatpush1.msra.mxu0 0.0
    %342 = vmatprep.subr.mxu0 0.0
    %343 = vmatpush1.msra.mxu0 0.0
    %344 = vmatprep.subr.mxu0 0.0
    %345 = vmatpush1.msra.mxu0 0.0
    %346 = vmatprep.subr.mxu0 0.0
    %347 = vmatpush1.msra.mxu0 0.0
    %348 = vmatprep.subr.mxu0 0.0
    %349 = vmatpush1.msra.mxu0 0.0
    %350 = vmatprep.mubr.f32.mxu0 0.0
    %351 = vmatmul.mubr.f32.gmra.mrb[0].mxu0 %v284
    %v352 = vpop.f32.mrb[0].mxu0
    %v353 = vadd.f32 0.0, %v352
    %v354 = vpop.f32.mrb[0].mxu0
    %355 = vdwg.mxu0
    %v357 = vsel %vm136, %v123, 0
    %359 = vmatprep.subr.mxu0 0.0
    %360 = vmatpush1.msra.mxu0 %v131
    %361 = vmatprep.subr.mxu0 0.0
    %362 = vmatpush1.msra.mxu0 0.0
    %363 = vmatprep.subr.mxu0 0.0
    %364 = vmatpush1.msra.mxu0 0.0
    %365 = vmatprep.subr.mxu0 0.0
    %366 = vmatpush1.msra.mxu0 0.0
    %367 = vmatprep.subr.mxu0 0.0
    %368 = vmatpush1.msra.mxu0 0.0
    %369 = vmatprep.subr.mxu0 0.0
    %370 = vmatpush1.msra.mxu0 0.0
    %371 = vmatprep.subr.mxu0 0.0
    %372 = vmatpush1.msra.mxu0 0.0
    %373 = vmatprep.subr.mxu0 0.0
    %374 = vmatpush1.msra.mxu0 0.0
    %375 = vmatprep.subr.mxu0 0.0
    %376 = vmatpush1.msra.mxu0 0.0
    %377 = vmatprep.subr.mxu0 0.0
    %378 = vmatpush1.msra.mxu0 0.0
    %379 = vmatprep.subr.mxu0 0.0
    %380 = vmatpush1.msra.mxu0 0.0
    %381 = vmatprep.subr.mxu0 0.0
    %382 = vmatpush1.msra.mxu0 0.0
    %383 = vmatprep.subr.mxu0 0.0
    %384 = vmatpush1.msra.mxu0 0.0
    %385 = vmatprep.subr.mxu0 0.0
    %386 = vmatpush1.msra.mxu0 0.0
    %387 = vmatprep.subr.mxu0 0.0
    %388 = vmatpush1.msra.mxu0 0.0
    %389 = vmatprep.subr.mxu0 0.0
    %390 = vmatpush1.msra.mxu0 0.0
    %391 = vmatprep.subr.mxu0 0.0
    %392 = vmatpush1.msra.mxu0 0.0
    %393 = vmatprep.subr.mxu0 0.0
    %394 = vmatpush1.msra.mxu0 0.0
    %395 = vmatprep.subr.mxu0 0.0
    %396 = vmatpush1.msra.mxu0 0.0
    %397 = vmatprep.subr.mxu0 0.0
    %398 = vmatpush1.msra.mxu0 0.0
    %399 = vmatprep.subr.mxu0 0.0
    %400 = vmatpush1.msra.mxu0 0.0
    %401 = vmatprep.subr.mxu0 0.0
    %402 = vmatpush1.msra.mxu0 0.0
    %403 = vmatprep.subr.mxu0 0.0
    %404 = vmatpush1.msra.mxu0 0.0
    %405 = vmatprep.subr.mxu0 0.0
    %406 = vmatpush1.msra.mxu0 0.0
    %407 = vmatprep.subr.mxu0 0.0
    %408 = vmatpush1.msra.mxu0 0.0
    %409 = vmatprep.subr.mxu0 0.0
    %410 = vmatpush1.msra.mxu0 0.0
    %411 = vmatprep.subr.mxu0 0.0
    %412 = vmatpush1.msra.mxu0 0.0
    %413 = vmatprep.subr.mxu0 0.0
    %414 = vmatpush1.msra.mxu0 0.0
    %415 = vmatprep.subr.mxu0 0.0
    %416 = vmatpush1.msra.mxu0 0.0
    %417 = vmatprep.subr.mxu0 0.0
    %418 = vmatpush1.msra.mxu0 0.0
    %419 = vmatprep.subr.mxu0 0.0
    %420 = vmatpush1.msra.mxu0 0.0
    %421 = vmatprep.subr.mxu0 0.0
    %422 = vmatpush1.msra.mxu0 0.0
    %423 = vmatprep.mubr.f32.mxu0 0.0
    %424 = vmatmul.mubr.f32.gmra.mrb[0].mxu0 %v357
    %v425 = vpop.f32.mrb[0].mxu0
    %v426 = vadd.f32 0.0, %v425
    %v427 = vpop.f32.mrb[0].mxu0
    %428 = vdwg.mxu0
    %v430 = vsel %vm136, %v124, 0
    %432 = vmatprep.subr.mxu0 0.0
    %433 = vmatpush1.msra.mxu0 %v132
    %434 = vmatprep.subr.mxu0 0.0
    %435 = vmatpush1.msra.mxu0 0.0
    %436 = vmatprep.subr.mxu0 0.0
    %437 = vmatpush1.msra.mxu0 0.0
    %438 = vmatprep.subr.mxu0 0.0
    %439 = vmatpush1.msra.mxu0 0.0
    %440 = vmatprep.subr.mxu0 0.0
    %441 = vmatpush1.msra.mxu0 0.0
    %442 = vmatprep.subr.mxu0 0.0
    %443 = vmatpush1.msra.mxu0 0.0
    %444 = vmatprep.subr.mxu0 0.0
    %445 = vmatpush1.msra.mxu0 0.0
    %446 = vmatprep.subr.mxu0 0.0
    %447 = vmatpush1.msra.mxu0 0.0
    %448 = vmatprep.subr.mxu0 0.0
    %449 = vmatpush1.msra.mxu0 0.0
    %450 = vmatprep.subr.mxu0 0.0
    %451 = vmatpush1.msra.mxu0 0.0
    %452 = vmatprep.subr.mxu0 0.0
    %453 = vmatpush1.msra.mxu0 0.0
    %454 = vmatprep.subr.mxu0 0.0
    %455 = vmatpush1.msra.mxu0 0.0
    %456 = vmatprep.subr.mxu0 0.0
    %457 = vmatpush1.msra.mxu0 0.0
    %458 = vmatprep.subr.mxu0 0.0
    %459 = vmatpush1.msra.mxu0 0.0
    %460 = vmatprep.subr.mxu0 0.0
    %461 = vmatpush1.msra.mxu0 0.0
    %462 = vmatprep.subr.mxu0 0.0
    %463 = vmatpush1.msra.mxu0 0.0
    %464 = vmatprep.subr.mxu0 0.0
    %465 = vmatpush1.msra.mxu0 0.0
    %466 = vmatprep.subr.mxu0 0.0
    %467 = vmatpush1.msra.mxu0 0.0
    %468 = vmatprep.subr.mxu0 0.0
    %469 = vmatpush1.msra.mxu0 0.0
    %470 = vmatprep.subr.mxu0 0.0
    %471 = vmatpush1.msra.mxu0 0.0
    %472 = vmatprep.subr.mxu0 0.0
    %473 = vmatpush1.msra.mxu0 0.0
    %474 = vmatprep.subr.mxu0 0.0
    %475 = vmatpush1.msra.mxu0 0.0
    %476 = vmatprep.subr.mxu0 0.0
    %477 = vmatpush1.msra.mxu0 0.0
    %478 = vmatprep.subr.mxu0 0.0
    %479 = vmatpush1.msra.mxu0 0.0
    %480 = vmatprep.subr.mxu0 0.0
    %481 = vmatpush1.msra.mxu0 0.0
    %482 = vmatprep.subr.mxu0 0.0
    %483 = vmatpush1.msra.mxu0 0.0
    %484 = vmatprep.subr.mxu0 0.0
    %485 = vmatpush1.msra.mxu0 0.0
    %486 = vmatprep.subr.mxu0 0.0
    %487 = vmatpush1.msra.mxu0 0.0
    %488 = vmatprep.subr.mxu0 0.0
    %489 = vmatpush1.msra.mxu0 0.0
    %490 = vmatprep.subr.mxu0 0.0
    %491 = vmatpush1.msra.mxu0 0.0
    %492 = vmatprep.subr.mxu0 0.0
    %493 = vmatpush1.msra.mxu0 0.0
    %494 = vmatprep.subr.mxu0 0.0
    %495 = vmatpush1.msra.mxu0 0.0
    %496 = vmatprep.mubr.f32.mxu0 0.0
    %497 = vmatmul.mubr.f32.gmra.mrb[0].mxu0 %v430
    %v498 = vpop.f32.mrb[0].mxu0
    %v499 = vadd.f32 0.0, %v498
    %v500 = vpop.f32.mrb[0].mxu0
    %501 = vdwg.mxu0
    %v503 = vsel %vm136, %v125, 0
    %505 = vmatprep.subr.mxu0 0.0
    %506 = vmatpush1.msra.mxu0 %v133
    %507 = vmatprep.subr.mxu0 0.0
    %508 = vmatpush1.msra.mxu0 0.0
    %509 = vmatprep.subr.mxu0 0.0
    %510 = vmatpush1.msra.mxu0 0.0
    %511 = vmatprep.subr.mxu0 0.0
    %512 = vmatpush1.msra.mxu0 0.0
    %513 = vmatprep.subr.mxu0 0.0
    %514 = vmatpush1.msra.mxu0 0.0
    %515 = vmatprep.subr.mxu0 0.0
    %516 = vmatpush1.msra.mxu0 0.0
    %517 = vmatprep.subr.mxu0 0.0
    %518 = vmatpush1.msra.mxu0 0.0
    %519 = vmatprep.subr.mxu0 0.0
    %520 = vmatpush1.msra.mxu0 0.0
    %521 = vmatprep.subr.mxu0 0.0
    %522 = vmatpush1.msra.mxu0 0.0
    %523 = vmatprep.subr.mxu0 0.0
    %524 = vmatpush1.msra.mxu0 0.0
    %525 = vmatprep.subr.mxu0 0.0
    %526 = vmatpush1.msra.mxu0 0.0
    %527 = vmatprep.subr.mxu0 0.0
    %528 = vmatpush1.msra.mxu0 0.0
    %529 = vmatprep.subr.mxu0 0.0
    %530 = vmatpush1.msra.mxu0 0.0
    %531 = vmatprep.subr.mxu0 0.0
    %532 = vmatpush1.msra.mxu0 0.0
    %533 = vmatprep.subr.mxu0 0.0
    %534 = vmatpush1.msra.mxu0 0.0
    %535 = vmatprep.subr.mxu0 0.0
    %536 = vmatpush1.msra.mxu0 0.0
    %537 = vmatprep.subr.mxu0 0.0
    %538 = vmatpush1.msra.mxu0 0.0
    %539 = vmatprep.subr.mxu0 0.0
    %540 = vmatpush1.msra.mxu0 0.0
    %541 = vmatprep.subr.mxu0 0.0
    %542 = vmatpush1.msra.mxu0 0.0
    %543 = vmatprep.subr.mxu0 0.0
    %544 = vmatpush1.msra.mxu0 0.0
    %545 = vmatprep.subr.mxu0 0.0
    %546 = vmatpush1.msra.mxu0 0.0
    %547 = vmatprep.subr.mxu0 0.0
    %548 = vmatpush1.msra.mxu0 0.0
    %549 = vmatprep.subr.mxu0 0.0
    %550 = vmatpush1.msra.mxu0 0.0
    %551 = vmatprep.subr.mxu0 0.0
    %552 = vmatpush1.msra.mxu0 0.0
    %553 = vmatprep.subr.mxu0 0.0
    %554 = vmatpush1.msra.mxu0 0.0
    %555 = vmatprep.subr.mxu0 0.0
    %556 = vmatpush1.msra.mxu0 0.0
    %557 = vmatprep.subr.mxu0 0.0
    %558 = vmatpush1.msra.mxu0 0.0
    %559 = vmatprep.subr.mxu0 0.0
    %560 = vmatpush1.msra.mxu0 0.0
    %561 = vmatprep.subr.mxu0 0.0
    %562 = vmatpush1.msra.mxu0 0.0
    %563 = vmatprep.subr.mxu0 0.0
    %564 = vmatpush1.msra.mxu0 0.0
    %565 = vmatprep.subr.mxu0 0.0
    %566 = vmatpush1.msra.mxu0 0.0
    %567 = vmatprep.subr.mxu0 0.0
    %568 = vmatpush1.msra.mxu0 0.0
    %569 = vmatprep.mubr.f32.mxu0 0.0
    %570 = vmatmul.mubr.f32.gmra.mrb[0].mxu0 %v503
    %v571 = vpop.f32.mrb[0].mxu0
    %v572 = vadd.f32 0.0, %v571
    %v573 = vpop.f32.mrb[0].mxu0
    %574 = vdwg.mxu0
    %v576 = vsel %vm136, %v126, 0
    %578 = vmatprep.subr.mxu0 0.0
    %579 = vmatpush1.msra.mxu0 %v134
    %580 = vmatprep.subr.mxu0 0.0
    %581 = vmatpush1.msra.mxu0 0.0
    %582 = vmatprep.subr.mxu0 0.0
    %583 = vmatpush1.msra.mxu0 0.0
    %584 = vmatprep.subr.mxu0 0.0
    %585 = vmatpush1.msra.mxu0 0.0
    %586 = vmatprep.subr.mxu0 0.0
    %587 = vmatpush1.msra.mxu0 0.0
    %588 = vmatprep.subr.mxu0 0.0
    %589 = vmatpush1.msra.mxu0 0.0
    %590 = vmatprep.subr.mxu0 0.0
    %591 = vmatpush1.msra.mxu0 0.0
    %592 = vmatprep.subr.mxu0 0.0
    %593 = vmatpush1.msra.mxu0 0.0
    %594 = vmatprep.subr.mxu0 0.0
    %595 = vmatpush1.msra.mxu0 0.0
    %596 = vmatprep.subr.mxu0 0.0
    %597 = vmatpush1.msra.mxu0 0.0
    %598 = vmatprep.subr.mxu0 0.0
    %599 = vmatpush1.msra.mxu0 0.0
    %600 = vmatprep.subr.mxu0 0.0
    %601 = vmatpush1.msra.mxu0 0.0
    %602 = vmatprep.subr.mxu0 0.0
    %603 = vmatpush1.msra.mxu0 0.0
    %604 = vmatprep.subr.mxu0 0.0
    %605 = vmatpush1.msra.mxu0 0.0
    %606 = vmatprep.subr.mxu0 0.0
    %607 = vmatpush1.msra.mxu0 0.0
    %608 = vmatprep.subr.mxu0 0.0
    %609 = vmatpush1.msra.mxu0 0.0
    %610 = vmatprep.subr.mxu0 0.0
    %611 = vmatpush1.msra.mxu0 0.0
    %612 = vmatprep.subr.mxu0 0.0
    %613 = vmatpush1.msra.mxu0 0.0
    %614 = vmatprep.subr.mxu0 0.0
    %615 = vmatpush1.msra.mxu0 0.0
    %616 = vmatprep.subr.mxu0 0.0
    %617 = vmatpush1.msra.mxu0 0.0
    %618 = vmatprep.subr.mxu0 0.0
    %619 = vmatpush1.msra.mxu0 0.0
    %620 = vmatprep.subr.mxu0 0.0
    %621 = vmatpush1.msra.mxu0 0.0
    %622 = vmatprep.subr.mxu0 0.0
    %623 = vmatpush1.msra.mxu0 0.0
    %624 = vmatprep.subr.mxu0 0.0
    %625 = vmatpush1.msra.mxu0 0.0
    %626 = vmatprep.subr.mxu0 0.0
    %627 = vmatpush1.msra.mxu0 0.0
    %628 = vmatprep.subr.mxu0 0.0
    %629 = vmatpush1.msra.mxu0 0.0
    %630 = vmatprep.subr.mxu0 0.0
    %631 = vmatpush1.msra.mxu0 0.0
    %632 = vmatprep.subr.mxu0 0.0
    %633 = vmatpush1.msra.mxu0 0.0
    %634 = vmatprep.subr.mxu0 0.0
    %635 = vmatpush1.msra.mxu0 0.0
    %636 = vmatprep.subr.mxu0 0.0
    %637 = vmatpush1.msra.mxu0 0.0
    %638 = vmatprep.subr.mxu0 0.0
    %639 = vmatpush1.msra.mxu0 0.0
    %640 = vmatprep.subr.mxu0 0.0
    %641 = vmatpush1.msra.mxu0 0.0
    %642 = vmatprep.mubr.f32.mxu0 0.0
    %643 = vmatmul.mubr.f32.gmra.mrb[0].mxu0 %v576
    %v644 = vpop.f32.mrb[0].mxu0
    %v645 = vadd.f32 0.0, %v644
    %v646 = vpop.f32.mrb[0].mxu0
    %647 = vdwg.mxu0
    %v649 = vsel %vm136, %v127, 0
    %651 = vmatprep.subr.mxu0 0.0
    %652 = vmatpush1.msra.mxu0 %v135
    %653 = vmatprep.subr.mxu0 0.0
    %654 = vmatpush1.msra.mxu0 0.0
    %655 = vmatprep.subr.mxu0 0.0
    %656 = vmatpush1.msra.mxu0 0.0
    %657 = vmatprep.subr.mxu0 0.0
    %658 = vmatpush1.msra.mxu0 0.0
    %659 = vmatprep.subr.mxu0 0.0
    %660 = vmatpush1.msra.mxu0 0.0
    %661 = vmatprep.subr.mxu0 0.0
    %662 = vmatpush1.msra.mxu0 0.0
    %663 = vmatprep.subr.mxu0 0.0
    %664 = vmatpush1.msra.mxu0 0.0
    %665 = vmatprep.subr.mxu0 0.0
    %666 = vmatpush1.msra.mxu0 0.0
    %667 = vmatprep.subr.mxu0 0.0
    %668 = vmatpush1.msra.mxu0 0.0
    %669 = vmatprep.subr.mxu0 0.0
    %670 = vmatpush1.msra.mxu0 0.0
    %671 = vmatprep.subr.mxu0 0.0
    %672 = vmatpush1.msra.mxu0 0.0
    %673 = vmatprep.subr.mxu0 0.0
    %674 = vmatpush1.msra.mxu0 0.0
    %675 = vmatprep.subr.mxu0 0.0
    %676 = vmatpush1.msra.mxu0 0.0
    %677 = vmatprep.subr.mxu0 0.0
    %678 = vmatpush1.msra.mxu0 0.0
    %679 = vmatprep.subr.mxu0 0.0
    %680 = vmatpush1.msra.mxu0 0.0
    %681 = vmatprep.subr.mxu0 0.0
    %682 = vmatpush1.msra.mxu0 0.0
    %683 = vmatprep.subr.mxu0 0.0
    %684 = vmatpush1.msra.mxu0 0.0
    %685 = vmatprep.subr.mxu0 0.0
    %686 = vmatpush1.msra.mxu0 0.0
    %687 = vmatprep.subr.mxu0 0.0
    %688 = vmatpush1.msra.mxu0 0.0
    %689 = vmatprep.subr.mxu0 0.0
    %690 = vmatpush1.msra.mxu0 0.0
    %691 = vmatprep.subr.mxu0 0.0
    %692 = vmatpush1.msra.mxu0 0.0
    %693 = vmatprep.subr.mxu0 0.0
    %694 = vmatpush1.msra.mxu0 0.0
    %695 = vmatprep.subr.mxu0 0.0
    %696 = vmatpush1.msra.mxu0 0.0
    %697 = vmatprep.subr.mxu0 0.0
    %698 = vmatpush1.msra.mxu0 0.0
    %699 = vmatprep.subr.mxu0 0.0
    %700 = vmatpush1.msra.mxu0 0.0
    %701 = vmatprep.subr.mxu0 0.0
    %702 = vmatpush1.msra.mxu0 0.0
    %703 = vmatprep.subr.mxu0 0.0
    %704 = vmatpush1.msra.mxu0 0.0
    %705 = vmatprep.subr.mxu0 0.0
    %706 = vmatpush1.msra.mxu0 0.0
    %707 = vmatprep.subr.mxu0 0.0
    %708 = vmatpush1.msra.mxu0 0.0
    %709 = vmatprep.subr.mxu0 0.0
    %710 = vmatpush1.msra.mxu0 0.0
    %711 = vmatprep.subr.mxu0 0.0
    %712 = vmatpush1.msra.mxu0 0.0
    %713 = vmatprep.subr.mxu0 0.0
    %714 = vmatpush1.msra.mxu0 0.0
    %715 = vmatprep.mubr.f32.mxu0 0.0
    %716 = vmatmul.mubr.f32.gmra.mrb[0].mxu0 %v649
    %v717 = vpop.f32.mrb[0].mxu0
    %v718 = vadd.f32 0.0, %v717
    %v719 = vpop.f32.mrb[0].mxu0
    %720 = vdwg.mxu0
    %vm721 = vcmask 95232
    %v722 = vsel %vm721, %v207, -inf
    %723 = vmax.xlane.f32.xlu0 %v722
    %v724 = vpop.xlane.xlu0 %723
    %v725 = vsel %vm721, %v280, -inf
    %726 = vmax.xlane.f32.xlu0 %v725
    %v727 = vpop.xlane.xlu0 %726
    %v728 = vsel %vm721, %v353, -inf
    %729 = vmax.xlane.f32.xlu0 %v728
    %v730 = vpop.xlane.xlu0 %729
    %v731 = vsel %vm721, %v426, -inf
    %732 = vmax.xlane.f32.xlu0 %v731
    %v733 = vpop.xlane.xlu0 %732
    %v734 = vsel %vm721, %v499, -inf
    %735 = vmax.xlane.f32.xlu0 %v734
    %v736 = vpop.xlane.xlu0 %735
    %v737 = vsel %vm721, %v572, -inf
    %738 = vmax.xlane.f32.xlu0 %v737
    %v739 = vpop.xlane.xlu0 %738
    %v740 = vsel %vm721, %v645, -inf
    %741 = vmax.xlane.f32.xlu0 %v740
    %v742 = vpop.xlane.xlu0 %741
    %v743 = vsel %vm721, %v718, -inf
    %744 = vmax.xlane.f32.xlu0 %v743
    %v745 = vpop.xlane.xlu0 %744
    %v746 = vsub.f32 %v207, %v724
    %v747 = vsub.f32 %v280, %v727
    %v748 = vsub.f32 %v353, %v730
    %v749 = vsub.f32 %v426, %v733
    %v750 = vsub.f32 %v499, %v736
    %v751 = vsub.f32 %v572, %v739
    %v752 = vsub.f32 %v645, %v742
    %v753 = vsub.f32 %v718, %v745
    %v754 = vmul.f32 %v746, 1.442695
    %v755 = vpow.pop %v754
    %v756 = vmul.f32 %v747, 1.442695
    %v757 = vpow.pop %v756
    %v758 = vmul.f32 %v748, 1.442695
    %v759 = vpow.pop %v758
    %v760 = vmul.f32 %v749, 1.442695
    %v761 = vpow.pop %v760
    %v762 = vmul.f32 %v750, 1.442695
    %v763 = vpow.pop %v762
    %v764 = vmul.f32 %v751, 1.442695
    %v765 = vpow.pop %v764
    %v766 = vmul.f32 %v752, 1.442695
    %v767 = vpow.pop %v766
    %v768 = vmul.f32 %v753, 1.442695
    %v769 = vpow.pop %v768
    %v770 = vsel %vm721, %v755, 0.0
    %771 = vadd.xlane.f32.xlu0 %v770
    %v772 = vpop.xlane.xlu0 %771
    %v773 = vsel %vm721, %v757, 0.0
    %774 = vadd.xlane.f32.xlu0 %v773
    %v775 = vpop.xlane.xlu0 %774
    %v776 = vsel %vm721, %v759, 0.0
    %777 = vadd.xlane.f32.xlu0 %v776
    %v778 = vpop.xlane.xlu0 %777
    %v779 = vsel %vm721, %v761, 0.0
    %780 = vadd.xlane.f32.xlu0 %v779
    %v781 = vpop.xlane.xlu0 %780
    %v782 = vsel %vm721, %v763, 0.0
    %783 = vadd.xlane.f32.xlu0 %v782
    %v784 = vpop.xlane.xlu0 %783
    %v785 = vsel %vm721, %v765, 0.0
    %786 = vadd.xlane.f32.xlu0 %v785
    %v787 = vpop.xlane.xlu0 %786
    %v788 = vsel %vm721, %v767, 0.0
    %789 = vadd.xlane.f32.xlu0 %v788
    %v790 = vpop.xlane.xlu0 %789
    %v791 = vsel %vm721, %v769, 0.0
    %792 = vadd.xlane.f32.xlu0 %v791
    %v793 = vpop.xlane.xlu0 %792
    %v794 = vrcp.pop %v772
    %v795 = vrcp.pop %v775
    %v796 = vrcp.pop %v778
    %v797 = vrcp.pop %v781
    %v798 = vrcp.pop %v784
    %v799 = vrcp.pop %v787
    %v800 = vrcp.pop %v790
    %v801 = vrcp.pop %v793
    %v802 = vmul.f32 %v755, %v794
    %v803 = vmul.f32 %v757, %v795
    %v804 = vmul.f32 %v759, %v796
    %v805 = vmul.f32 %v761, %v797
    %v806 = vmul.f32 %v763, %v798
    %v807 = vmul.f32 %v765, %v799
    %v808 = vmul.f32 %v767, %v800
    %v809 = vmul.f32 %v769, %v801
    %v810 = vld [vmem:[%s1] sm:$0xff]
    %v811 = vld [vmem:[%s1 + $0x8] sm:$0xf]
    %v812 = vld [vmem:[%s1 + $0x10] sm:$0xff]
    %v813 = vld [vmem:[%s1 + $0x18] sm:$0xf]
    %v814 = vld [vmem:[%s1 + $0x20] sm:$0xff]
    %v815 = vld [vmem:[%s1 + $0x28] sm:$0xf]
    %v816 = vld [vmem:[%s1 + $0x30] sm:$0xff]
    %v817 = vld [vmem:[%s1 + $0x38] sm:$0xf]
    %v818 = vld [vmem:[%s1 + $0x40] sm:$0xff]
    %v819 = vld [vmem:[%s1 + $0x48] sm:$0xf]
    %v820 = vld [vmem:[%s1 + $0x50] sm:$0xff]
    %v821 = vld [vmem:[%s1 + $0x58] sm:$0xf]
    %v822 = vld [vmem:[%s1 + $0x60] sm:$0xff]
    %v823 = vld [vmem:[%s1 + $0x68] sm:$0xf]
    %v824 = vld [vmem:[%s1 + $0x70] sm:$0xff]
    %v825 = vld [vmem:[%s1 + $0x78] sm:$0xf]
    %vm826 = vcmask 97280
    %v828 = vsel %vm826, %v802, 0
    %vm830 = vcmask 1043456
    %v832 = vsel %vm830, %v811, 0
    %834 = vmatprep.subr.mxu0 0.0
    %835 = vmatpush1.msra.mxu0 %v810
    %836 = vmatprep.subr.mxu0 0.0
    %837 = vmatpush1.msra.mxu0 %v832
    %838 = vmatprep.subr.mxu0 0.0
    %839 = vmatpush1.msra.mxu0 0.0
    %840 = vmatprep.subr.mxu0 0.0
    %841 = vmatpush1.msra.mxu0 0.0
    %842 = vmatprep.subr.mxu0 0.0
    %843 = vmatpush1.msra.mxu0 0.0
    %844 = vmatprep.subr.mxu0 0.0
    %845 = vmatpush1.msra.mxu0 0.0
    %846 = vmatprep.subr.mxu0 0.0
    %847 = vmatpush1.msra.mxu0 0.0
    %848 = vmatprep.subr.mxu0 0.0
    %849 = vmatpush1.msra.mxu0 0.0
    %850 = vmatprep.subr.mxu0 0.0
    %851 = vmatpush1.msra.mxu0 0.0
    %852 = vmatprep.subr.mxu0 0.0
    %853 = vmatpush1.msra.mxu0 0.0
    %854 = vmatprep.subr.mxu0 0.0
    %855 = vmatpush1.msra.mxu0 0.0
    %856 = vmatprep.subr.mxu0 0.0
    %857 = vmatpush1.msra.mxu0 0.0
    %858 = vmatprep.subr.mxu0 0.0
    %859 = vmatpush1.msra.mxu0 0.0
    %860 = vmatprep.subr.mxu0 0.0
    %861 = vmatpush1.msra.mxu0 0.0
    %862 = vmatprep.subr.mxu0 0.0
    %863 = vmatpush1.msra.mxu0 0.0
    %864 = vmatprep.subr.mxu0 0.0
    %865 = vmatpush1.msra.mxu0 0.0
    %866 = vmatprep.subr.mxu0 0.0
    %867 = vmatpush1.msra.mxu0 0.0
    %868 = vmatprep.subr.mxu0 0.0
    %869 = vmatpush1.msra.mxu0 0.0
    %870 = vmatprep.subr.mxu0 0.0
    %871 = vmatpush1.msra.mxu0 0.0
    %872 = vmatprep.subr.mxu0 0.0
    %873 = vmatpush1.msra.mxu0 0.0
    %874 = vmatprep.subr.mxu0 0.0
    %875 = vmatpush1.msra.mxu0 0.0
    %876 = vmatprep.subr.mxu0 0.0
    %877 = vmatpush1.msra.mxu0 0.0
    %878 = vmatprep.subr.mxu0 0.0
    %879 = vmatpush1.msra.mxu0 0.0
    %880 = vmatprep.subr.mxu0 0.0
    %881 = vmatpush1.msra.mxu0 0.0
    %882 = vmatprep.subr.mxu0 0.0
    %883 = vmatpush1.msra.mxu0 0.0
    %884 = vmatprep.subr.mxu0 0.0
    %885 = vmatpush1.msra.mxu0 0.0
    %886 = vmatprep.subr.mxu0 0.0
    %887 = vmatpush1.msra.mxu0 0.0
    %888 = vmatprep.subr.mxu0 0.0
    %889 = vmatpush1.msra.mxu0 0.0
    %890 = vmatprep.subr.mxu0 0.0
    %891 = vmatpush1.msra.mxu0 0.0
    %892 = vmatprep.subr.mxu0 0.0
    %893 = vmatpush1.msra.mxu0 0.0
    %894 = vmatprep.subr.mxu0 0.0
    %895 = vmatpush1.msra.mxu0 0.0
    %896 = vmatprep.subr.mxu0 0.0
    %897 = vmatpush1.msra.mxu0 0.0
    %898 = vmatprep.mubr.f32.mxu0 0.0
    %899 = vmatmul.mubr.f32.gmra.mrb[0].mxu0 %v828
    %v900 = vpop.f32.mrb[0].mxu0
    %v901 = vadd.f32 0.0, %v900
    %v902 = vpop.f32.mrb[0].mxu0
    %903 = vdwg.mxu0
    %v905 = vsel %vm826, %v803, 0
    %v908 = vsel %vm830, %v813, 0
    %910 = vmatprep.subr.mxu0 0.0
    %911 = vmatpush1.msra.mxu0 %v812
    %912 = vmatprep.subr.mxu0 0.0
    %913 = vmatpush1.msra.mxu0 %v908
    %914 = vmatprep.subr.mxu0 0.0
    %915 = vmatpush1.msra.mxu0 0.0
    %916 = vmatprep.subr.mxu0 0.0
    %917 = vmatpush1.msra.mxu0 0.0
    %918 = vmatprep.subr.mxu0 0.0
    %919 = vmatpush1.msra.mxu0 0.0
    %920 = vmatprep.subr.mxu0 0.0
    %921 = vmatpush1.msra.mxu0 0.0
    %922 = vmatprep.subr.mxu0 0.0
    %923 = vmatpush1.msra.mxu0 0.0
    %924 = vmatprep.subr.mxu0 0.0
    %925 = vmatpush1.msra.mxu0 0.0
    %926 = vmatprep.subr.mxu0 0.0
    %927 = vmatpush1.msra.mxu0 0.0
    %928 = vmatprep.subr.mxu0 0.0
    %929 = vmatpush1.msra.mxu0 0.0
    %930 = vmatprep.subr.mxu0 0.0
    %931 = vmatpush1.msra.mxu0 0.0
    %932 = vmatprep.subr.mxu0 0.0
    %933 = vmatpush1.msra.mxu0 0.0
    %934 = vmatprep.subr.mxu0 0.0
    %935 = vmatpush1.msra.mxu0 0.0
    %936 = vmatprep.subr.mxu0 0.0
    %937 = vmatpush1.msra.mxu0 0.0
    %938 = vmatprep.subr.mxu0 0.0
    %939 = vmatpush1.msra.mxu0 0.0
    %940 = vmatprep.subr.mxu0 0.0
    %941 = vmatpush1.msra.mxu0 0.0
    %942 = vmatprep.subr.mxu0 0.0
    %943 = vmatpush1.msra.mxu0 0.0
    %944 = vmatprep.subr.mxu0 0.0
    %945 = vmatpush1.msra.mxu0 0.0
    %946 = vmatprep.subr.mxu0 0.0
    %947 = vmatpush1.msra.mxu0 0.0
    %948 = vmatprep.subr.mxu0 0.0
    %949 = vmatpush1.msra.mxu0 0.0
    %950 = vmatprep.subr.mxu0 0.0
    %951 = vmatpush1.msra.mxu0 0.0
    %952 = vmatprep.subr.mxu0 0.0
    %953 = vmatpush1.msra.mxu0 0.0
    %954 = vmatprep.subr.mxu0 0.0
    %955 = vmatpush1.msra.mxu0 0.0
    %956 = vmatprep.subr.mxu0 0.0
    %957 = vmatpush1.msra.mxu0 0.0
    %958 = vmatprep.subr.mxu0 0.0
    %959 = vmatpush1.msra.mxu0 0.0
    %960 = vmatprep.subr.mxu0 0.0
    %961 = vmatpush1.msra.mxu0 0.0
    %962 = vmatprep.subr.mxu0 0.0
    %963 = vmatpush1.msra.mxu0 0.0
    %964 = vmatprep.subr.mxu0 0.0
    %965 = vmatpush1.msra.mxu0 0.0
    %966 = vmatprep.subr.mxu0 0.0
    %967 = vmatpush1.msra.mxu0 0.0
    %968 = vmatprep.subr.mxu0 0.0
    %969 = vmatpush1.msra.mxu0 0.0
    %970 = vmatprep.subr.mxu0 0.0
    %971 = vmatpush1.msra.mxu0 0.0
    %972 = vmatprep.subr.mxu0 0.0
    %973 = vmatpush1.msra.mxu0 0.0
    %974 = vmatprep.mubr.f32.mxu0 0.0
    %975 = vmatmul.mubr.f32.gmra.mrb[0].mxu0 %v905
    %v976 = vpop.f32.mrb[0].mxu0
    %v977 = vadd.f32 0.0, %v976
    %v978 = vpop.f32.mrb[0].mxu0
    %979 = vdwg.mxu0
    %v981 = vsel %vm826, %v804, 0
    %v984 = vsel %vm830, %v815, 0
    %986 = vmatprep.subr.mxu0 0.0
    %987 = vmatpush1.msra.mxu0 %v814
    %988 = vmatprep.subr.mxu0 0.0
    %989 = vmatpush1.msra.mxu0 %v984
    %990 = vmatprep.subr.mxu0 0.0
    %991 = vmatpush1.msra.mxu0 0.0
    %992 = vmatprep.subr.mxu0 0.0
    %993 = vmatpush1.msra.mxu0 0.0
    %994 = vmatprep.subr.mxu0 0.0
    %995 = vmatpush1.msra.mxu0 0.0
    %996 = vmatprep.subr.mxu0 0.0
    %997 = vmatpush1.msra.mxu0 0.0
    %998 = vmatprep.subr.mxu0 0.0
    %999 = vmatpush1.msra.mxu0 0.0
    %1000 = vmatprep.subr.mxu0 0.0
    %1001 = vmatpush1.msra.mxu0 0.0
    %1002 = vmatprep.subr.mxu0 0.0
    %1003 = vmatpush1.msra.mxu0 0.0
    %1004 = vmatprep.subr.mxu0 0.0
    %1005 = vmatpush1.msra.mxu0 0.0
    %1006 = vmatprep.subr.mxu0 0.0
    %1007 = vmatpush1.msra.mxu0 0.0
    %1008 = vmatprep.subr.mxu0 0.0
    %1009 = vmatpush1.msra.mxu0 0.0
    %1010 = vmatprep.subr.mxu0 0.0
    %1011 = vmatpush1.msra.mxu0 0.0
    %1012 = vmatprep.subr.mxu0 0.0
    %1013 = vmatpush1.msra.mxu0 0.0
    %1014 = vmatprep.subr.mxu0 0.0
    %1015 = vmatpush1.msra.mxu0 0.0
    %1016 = vmatprep.subr.mxu0 0.0
    %1017 = vmatpush1.msra.mxu0 0.0
    %1018 = vmatprep.subr.mxu0 0.0
    %1019 = vmatpush1.msra.mxu0 0.0
    %1020 = vmatprep.subr.mxu0 0.0
    %1021 = vmatpush1.msra.mxu0 0.0
    %1022 = vmatprep.subr.mxu0 0.0
    %1023 = vmatpush1.msra.mxu0 0.0
    %1024 = vmatprep.subr.mxu0 0.0
    %1025 = vmatpush1.msra.mxu0 0.0
    %1026 = vmatprep.subr.mxu0 0.0
    %1027 = vmatpush1.msra.mxu0 0.0
    %1028 = vmatprep.subr.mxu0 0.0
    %1029 = vmatpush1.msra.mxu0 0.0
    %1030 = vmatprep.subr.mxu0 0.0
    %1031 = vmatpush1.msra.mxu0 0.0
    %1032 = vmatprep.subr.mxu0 0.0
    %1033 = vmatpush1.msra.mxu0 0.0
    %1034 = vmatprep.subr.mxu0 0.0
    %1035 = vmatpush1.msra.mxu0 0.0
    %1036 = vmatprep.subr.mxu0 0.0
    %1037 = vmatpush1.msra.mxu0 0.0
    %1038 = vmatprep.subr.mxu0 0.0
    %1039 = vmatpush1.msra.mxu0 0.0
    %1040 = vmatprep.subr.mxu0 0.0
    %1041 = vmatpush1.msra.mxu0 0.0
    %1042 = vmatprep.subr.mxu0 0.0
    %1043 = vmatpush1.msra.mxu0 0.0
    %1044 = vmatprep.subr.mxu0 0.0
    %1045 = vmatpush1.msra.mxu0 0.0
    %1046 = vmatprep.subr.mxu0 0.0
    %1047 = vmatpush1.msra.mxu0 0.0
    %1048 = vmatprep.subr.mxu0 0.0
    %1049 = vmatpush1.msra.mxu0 0.0
    %1050 = vmatprep.mubr.f32.mxu0 0.0
    %1051 = vmatmul.mubr.f32.gmra.mrb[0].mxu0 %v981
    %v1052 = vpop.f32.mrb[0].mxu0
    %v1053 = vadd.f32 0.0, %v1052
    %v1054 = vpop.f32.mrb[0].mxu0
    %1055 = vdwg.mxu0
    %v1057 = vsel %vm826, %v805, 0
    %v1060 = vsel %vm830, %v817, 0
    %1062 = vmatprep.subr.mxu0 0.0
    %1063 = vmatpush1.msra.mxu0 %v816
    %1064 = vmatprep.subr.mxu0 0.0
    %1065 = vmatpush1.msra.mxu0 %v1060
    %1066 = vmatprep.subr.mxu0 0.0
    %1067 = vmatpush1.msra.mxu0 0.0
    %1068 = vmatprep.subr.mxu0 0.0
    %1069 = vmatpush1.msra.mxu0 0.0
    %1070 = vmatprep.subr.mxu0 0.0
    %1071 = vmatpush1.msra.mxu0 0.0
    %1072 = vmatprep.subr.mxu0 0.0
    %1073 = vmatpush1.msra.mxu0 0.0
    %1074 = vmatprep.subr.mxu0 0.0
    %1075 = vmatpush1.msra.mxu0 0.0
    %1076 = vmatprep.subr.mxu0 0.0
    %1077 = vmatpush1.msra.mxu0 0.0
    %1078 = vmatprep.subr.mxu0 0.0
    %1079 = vmatpush1.msra.mxu0 0.0
    %1080 = vmatprep.subr.mxu0 0.0
    %1081 = vmatpush1.msra.mxu0 0.0
    %1082 = vmatprep.subr.mxu0 0.0
    %1083 = vmatpush1.msra.mxu0 0.0
    %1084 = vmatprep.subr.mxu0 0.0
    %1085 = vmatpush1.msra.mxu0 0.0
    %1086 = vmatprep.subr.mxu0 0.0
    %1087 = vmatpush1.msra.mxu0 0.0
    %1088 = vmatprep.subr.mxu0 0.0
    %1089 = vmatpush1.msra.mxu0 0.0
    %1090 = vmatprep.subr.mxu0 0.0
    %1091 = vmatpush1.msra.mxu0 0.0
    %1092 = vmatprep.subr.mxu0 0.0
    %1093 = vmatpush1.msra.mxu0 0.0
    %1094 = vmatprep.subr.mxu0 0.0
    %1095 = vmatpush1.msra.mxu0 0.0
    %1096 = vmatprep.subr.mxu0 0.0
    %1097 = vmatpush1.msra.mxu0 0.0
    %1098 = vmatprep.subr.mxu0 0.0
    %1099 = vmatpush1.msra.mxu0 0.0
    %1100 = vmatprep.subr.mxu0 0.0
    %1101 = vmatpush1.msra.mxu0 0.0
    %1102 = vmatprep.subr.mxu0 0.0
    %1103 = vmatpush1.msra.mxu0 0.0
    %1104 = vmatprep.subr.mxu0 0.0
    %1105 = vmatpush1.msra.mxu0 0.0
    %1106 = vmatprep.subr.mxu0 0.0
    %1107 = vmatpush1.msra.mxu0 0.0
    %1108 = vmatprep.subr.mxu0 0.0
    %1109 = vmatpush1.msra.mxu0 0.0
    %1110 = vmatprep.subr.mxu0 0.0
    %1111 = vmatpush1.msra.mxu0 0.0
    %1112 = vmatprep.subr.mxu0 0.0
    %1113 = vmatpush1.msra.mxu0 0.0
    %1114 = vmatprep.subr.mxu0 0.0
    %1115 = vmatpush1.msra.mxu0 0.0
    %1116 = vmatprep.subr.mxu0 0.0
    %1117 = vmatpush1.msra.mxu0 0.0
    %1118 = vmatprep.subr.mxu0 0.0
    %1119 = vmatpush1.msra.mxu0 0.0
    %1120 = vmatprep.subr.mxu0 0.0
    %1121 = vmatpush1.msra.mxu0 0.0
    %1122 = vmatprep.subr.mxu0 0.0
    %1123 = vmatpush1.msra.mxu0 0.0
    %1124 = vmatprep.subr.mxu0 0.0
    %1125 = vmatpush1.msra.mxu0 0.0
    %1126 = vmatprep.mubr.f32.mxu0 0.0
    %1127 = vmatmul.mubr.f32.gmra.mrb[0].mxu0 %v1057
    %v1128 = vpop.f32.mrb[0].mxu0
    %v1129 = vadd.f32 0.0, %v1128
    %v1130 = vpop.f32.mrb[0].mxu0
    %1131 = vdwg.mxu0
    %v1133 = vsel %vm826, %v806, 0
    %v1136 = vsel %vm830, %v819, 0
    %1138 = vmatprep.subr.mxu0 0.0
    %1139 = vmatpush1.msra.mxu0 %v818
    %1140 = vmatprep.subr.mxu0 0.0
    %1141 = vmatpush1.msra.mxu0 %v1136
    %1142 = vmatprep.subr.mxu0 0.0
    %1143 = vmatpush1.msra.mxu0 0.0
    %1144 = vmatprep.subr.mxu0 0.0
    %1145 = vmatpush1.msra.mxu0 0.0
    %1146 = vmatprep.subr.mxu0 0.0
    %1147 = vmatpush1.msra.mxu0 0.0
    %1148 = vmatprep.subr.mxu0 0.0
    %1149 = vmatpush1.msra.mxu0 0.0
    %1150 = vmatprep.subr.mxu0 0.0
    %1151 = vmatpush1.msra.mxu0 0.0
    %1152 = vmatprep.subr.mxu0 0.0
    %1153 = vmatpush1.msra.mxu0 0.0
    %1154 = vmatprep.subr.mxu0 0.0
    %1155 = vmatpush1.msra.mxu0 0.0
    %1156 = vmatprep.subr.mxu0 0.0
    %1157 = vmatpush1.msra.mxu0 0.0
    %1158 = vmatprep.subr.mxu0 0.0
    %1159 = vmatpush1.msra.mxu0 0.0
    %1160 = vmatprep.subr.mxu0 0.0
    %1161 = vmatpush1.msra.mxu0 0.0
    %1162 = vmatprep.subr.mxu0 0.0
    %1163 = vmatpush1.msra.mxu0 0.0
    %1164 = vmatprep.subr.mxu0 0.0
    %1165 = vmatpush1.msra.mxu0 0.0
    %1166 = vmatprep.subr.mxu0 0.0
    %1167 = vmatpush1.msra.mxu0 0.0
    %1168 = vmatprep.subr.mxu0 0.0
    %1169 = vmatpush1.msra.mxu0 0.0
    %1170 = vmatprep.subr.mxu0 0.0
    %1171 = vmatpush1.msra.mxu0 0.0
    %1172 = vmatprep.subr.mxu0 0.0
    %1173 = vmatpush1.msra.mxu0 0.0
    %1174 = vmatprep.subr.mxu0 0.0
    %1175 = vmatpush1.msra.mxu0 0.0
    %1176 = vmatprep.subr.mxu0 0.0
    %1177 = vmatpush1.msra.mxu0 0.0
    %1178 = vmatprep.subr.mxu0 0.0
    %1179 = vmatpush1.msra.mxu0 0.0
    %1180 = vmatprep.subr.mxu0 0.0
    %1181 = vmatpush1.msra.mxu0 0.0
    %1182 = vmatprep.subr.mxu0 0.0
    %1183 = vmatpush1.msra.mxu0 0.0
    %1184 = vmatprep.subr.mxu0 0.0
    %1185 = vmatpush1.msra.mxu0 0.0
    %1186 = vmatprep.subr.mxu0 0.0
    %1187 = vmatpush1.msra.mxu0 0.0
    %1188 = vmatprep.subr.mxu0 0.0
    %1189 = vmatpush1.msra.mxu0 0.0
    %1190 = vmatprep.subr.mxu0 0.0
    %1191 = vmatpush1.msra.mxu0 0.0
    %1192 = vmatprep.subr.mxu0 0.0
    %1193 = vmatpush1.msra.mxu0 0.0
    %1194 = vmatprep.subr.mxu0 0.0
    %1195 = vmatpush1.msra.mxu0 0.0
    %1196 = vmatprep.subr.mxu0 0.0
    %1197 = vmatpush1.msra.mxu0 0.0
    %1198 = vmatprep.subr.mxu0 0.0
    %1199 = vmatpush1.msra.mxu0 0.0
    %1200 = vmatprep.subr.mxu0 0.0
    %1201 = vmatpush1.msra.mxu0 0.0
    %1202 = vmatprep.mubr.f32.mxu0 0.0
    %1203 = vmatmul.mubr.f32.gmra.mrb[0].mxu0 %v1133
    %v1204 = vpop.f32.mrb[0].mxu0
    %v1205 = vadd.f32 0.0, %v1204
    %v1206 = vpop.f32.mrb[0].mxu0
    %1207 = vdwg.mxu0
    %v1209 = vsel %vm826, %v807, 0
    %v1212 = vsel %vm830, %v821, 0
    %1214 = vmatprep.subr.mxu0 0.0
    %1215 = vmatpush1.msra.mxu0 %v820
    %1216 = vmatprep.subr.mxu0 0.0
    %1217 = vmatpush1.msra.mxu0 %v1212
    %1218 = vmatprep.subr.mxu0 0.0
    %1219 = vmatpush1.msra.mxu0 0.0
    %1220 = vmatprep.subr.mxu0 0.0
    %1221 = vmatpush1.msra.mxu0 0.0
    %1222 = vmatprep.subr.mxu0 0.0
    %1223 = vmatpush1.msra.mxu0 0.0
    %1224 = vmatprep.subr.mxu0 0.0
    %1225 = vmatpush1.msra.mxu0 0.0
    %1226 = vmatprep.subr.mxu0 0.0
    %1227 = vmatpush1.msra.mxu0 0.0
    %1228 = vmatprep.subr.mxu0 0.0
    %1229 = vmatpush1.msra.mxu0 0.0
    %1230 = vmatprep.subr.mxu0 0.0
    %1231 = vmatpush1.msra.mxu0 0.0
    %1232 = vmatprep.subr.mxu0 0.0
    %1233 = vmatpush1.msra.mxu0 0.0
    %1234 = vmatprep.subr.mxu0 0.0
    %1235 = vmatpush1.msra.mxu0 0.0
    %1236 = vmatprep.subr.mxu0 0.0
    %1237 = vmatpush1.msra.mxu0 0.0
    %1238 = vmatprep.subr.mxu0 0.0
    %1239 = vmatpush1.msra.mxu0 0.0
    %1240 = vmatprep.subr.mxu0 0.0
    %1241 = vmatpush1.msra.mxu0 0.0
    %1242 = vmatprep.subr.mxu0 0.0
    %1243 = vmatpush1.msra.mxu0 0.0
    %1244 = vmatprep.subr.mxu0 0.0
    %1245 = vmatpush1.msra.mxu0 0.0
    %1246 = vmatprep.subr.mxu0 0.0
    %1247 = vmatpush1.msra.mxu0 0.0
    %1248 = vmatprep.subr.mxu0 0.0
    %1249 = vmatpush1.msra.mxu0 0.0
    %1250 = vmatprep.subr.mxu0 0.0
    %1251 = vmatpush1.msra.mxu0 0.0
    %1252 = vmatprep.subr.mxu0 0.0
    %1253 = vmatpush1.msra.mxu0 0.0
    %1254 = vmatprep.subr.mxu0 0.0
    %1255 = vmatpush1.msra.mxu0 0.0
    %1256 = vmatprep.subr.mxu0 0.0
    %1257 = vmatpush1.msra.mxu0 0.0
    %1258 = vmatprep.subr.mxu0 0.0
    %1259 = vmatpush1.msra.mxu0 0.0
    %1260 = vmatprep.subr.mxu0 0.0
    %1261 = vmatpush1.msra.mxu0 0.0
    %1262 = vmatprep.subr.mxu0 0.0
    %1263 = vmatpush1.msra.mxu0 0.0
    %1264 = vmatprep.subr.mxu0 0.0
    %1265 = vmatpush1.msra.mxu0 0.0
    %1266 = vmatprep.subr.mxu0 0.0
    %1267 = vmatpush1.msra.mxu0 0.0
    %1268 = vmatprep.subr.mxu0 0.0
    %1269 = vmatpush1.msra.mxu0 0.0
    %1270 = vmatprep.subr.mxu0 0.0
    %1271 = vmatpush1.msra.mxu0 0.0
    %1272 = vmatprep.subr.mxu0 0.0
    %1273 = vmatpush1.msra.mxu0 0.0
    %1274 = vmatprep.subr.mxu0 0.0
    %1275 = vmatpush1.msra.mxu0 0.0
    %1276 = vmatprep.subr.mxu0 0.0
    %1277 = vmatpush1.msra.mxu0 0.0
    %1278 = vmatprep.mubr.f32.mxu0 0.0
    %1279 = vmatmul.mubr.f32.gmra.mrb[0].mxu0 %v1209
    %v1280 = vpop.f32.mrb[0].mxu0
    %v1281 = vadd.f32 0.0, %v1280
    %v1282 = vpop.f32.mrb[0].mxu0
    %1283 = vdwg.mxu0
    %v1285 = vsel %vm826, %v808, 0
    %v1288 = vsel %vm830, %v823, 0
    %1290 = vmatprep.subr.mxu0 0.0
    %1291 = vmatpush1.msra.mxu0 %v822
    %1292 = vmatprep.subr.mxu0 0.0
    %1293 = vmatpush1.msra.mxu0 %v1288
    %1294 = vmatprep.subr.mxu0 0.0
    %1295 = vmatpush1.msra.mxu0 0.0
    %1296 = vmatprep.subr.mxu0 0.0
    %1297 = vmatpush1.msra.mxu0 0.0
    %1298 = vmatprep.subr.mxu0 0.0
    %1299 = vmatpush1.msra.mxu0 0.0
    %1300 = vmatprep.subr.mxu0 0.0
    %1301 = vmatpush1.msra.mxu0 0.0
    %1302 = vmatprep.subr.mxu0 0.0
    %1303 = vmatpush1.msra.mxu0 0.0
    %1304 = vmatprep.subr.mxu0 0.0
    %1305 = vmatpush1.msra.mxu0 0.0
    %1306 = vmatprep.subr.mxu0 0.0
    %1307 = vmatpush1.msra.mxu0 0.0
    %1308 = vmatprep.subr.mxu0 0.0
    %1309 = vmatpush1.msra.mxu0 0.0
    %1310 = vmatprep.subr.mxu0 0.0
    %1311 = vmatpush1.msra.mxu0 0.0
    %1312 = vmatprep.subr.mxu0 0.0
    %1313 = vmatpush1.msra.mxu0 0.0
    %1314 = vmatprep.subr.mxu0 0.0
    %1315 = vmatpush1.msra.mxu0 0.0
    %1316 = vmatprep.subr.mxu0 0.0
    %1317 = vmatpush1.msra.mxu0 0.0
    %1318 = vmatprep.subr.mxu0 0.0
    %1319 = vmatpush1.msra.mxu0 0.0
    %1320 = vmatprep.subr.mxu0 0.0
    %1321 = vmatpush1.msra.mxu0 0.0
    %1322 = vmatprep.subr.mxu0 0.0
    %1323 = vmatpush1.msra.mxu0 0.0
    %1324 = vmatprep.subr.mxu0 0.0
    %1325 = vmatpush1.msra.mxu0 0.0
    %1326 = vmatprep.subr.mxu0 0.0
    %1327 = vmatpush1.msra.mxu0 0.0
    %1328 = vmatprep.subr.mxu0 0.0
    %1329 = vmatpush1.msra.mxu0 0.0
    %1330 = vmatprep.subr.mxu0 0.0
    %1331 = vmatpush1.msra.mxu0 0.0
    %1332 = vmatprep.subr.mxu0 0.0
    %1333 = vmatpush1.msra.mxu0 0.0
    %1334 = vmatprep.subr.mxu0 0.0
    %1335 = vmatpush1.msra.mxu0 0.0
    %1336 = vmatprep.subr.mxu0 0.0
    %1337 = vmatpush1.msra.mxu0 0.0
    %1338 = vmatprep.subr.mxu0 0.0
    %1339 = vmatpush1.msra.mxu0 0.0
    %1340 = vmatprep.subr.mxu0 0.0
    %1341 = vmatpush1.msra.mxu0 0.0
    %1342 = vmatprep.subr.mxu0 0.0
    %1343 = vmatpush1.msra.mxu0 0.0
    %1344 = vmatprep.subr.mxu0 0.0
    %1345 = vmatpush1.msra.mxu0 0.0
    %1346 = vmatprep.subr.mxu0 0.0
    %1347 = vmatpush1.msra.mxu0 0.0
    %1348 = vmatprep.subr.mxu0 0.0
    %1349 = vmatpush1.msra.mxu0 0.0
    %1350 = vmatprep.subr.mxu0 0.0
    %1351 = vmatpush1.msra.mxu0 0.0
    %1352 = vmatprep.subr.mxu0 0.0
    %1353 = vmatpush1.msra.mxu0 0.0
    %1354 = vmatprep.mubr.f32.mxu0 0.0
    %1355 = vmatmul.mubr.f32.gmra.mrb[0].mxu0 %v1285
    %v1356 = vpop.f32.mrb[0].mxu0
    %v1357 = vadd.f32 0.0, %v1356
    %v1358 = vpop.f32.mrb[0].mxu0
    %1359 = vdwg.mxu0
    %v1361 = vsel %vm826, %v809, 0
    %v1364 = vsel %vm830, %v825, 0
    %1366 = vmatprep.subr.mxu0 0.0
    %1367 = vmatpush1.msra.mxu0 %v824
    %1368 = vmatprep.subr.mxu0 0.0
    %1369 = vmatpush1.msra.mxu0 %v1364
    %1370 = vmatprep.subr.mxu0 0.0
    %1371 = vmatpush1.msra.mxu0 0.0
    %1372 = vmatprep.subr.mxu0 0.0
    %1373 = vmatpush1.msra.mxu0 0.0
    %1374 = vmatprep.subr.mxu0 0.0
    %1375 = vmatpush1.msra.mxu0 0.0
    %1376 = vmatprep.subr.mxu0 0.0
    %1377 = vmatpush1.msra.mxu0 0.0
    %1378 = vmatprep.subr.mxu0 0.0
    %1379 = vmatpush1.msra.mxu0 0.0
    %1380 = vmatprep.subr.mxu0 0.0
    %1381 = vmatpush1.msra.mxu0 0.0
    %1382 = vmatprep.subr.mxu0 0.0
    %1383 = vmatpush1.msra.mxu0 0.0
    %1384 = vmatprep.subr.mxu0 0.0
    %1385 = vmatpush1.msra.mxu0 0.0
    %1386 = vmatprep.subr.mxu0 0.0
    %1387 = vmatpush1.msra.mxu0 0.0
    %1388 = vmatprep.subr.mxu0 0.0
    %1389 = vmatpush1.msra.mxu0 0.0
    %1390 = vmatprep.subr.mxu0 0.0
    %1391 = vmatpush1.msra.mxu0 0.0
    %1392 = vmatprep.subr.mxu0 0.0
    %1393 = vmatpush1.msra.mxu0 0.0
    %1394 = vmatprep.subr.mxu0 0.0
    %1395 = vmatpush1.msra.mxu0 0.0
    %1396 = vmatprep.subr.mxu0 0.0
    %1397 = vmatpush1.msra.mxu0 0.0
    %1398 = vmatprep.subr.mxu0 0.0
    %1399 = vmatpush1.msra.mxu0 0.0
    %1400 = vmatprep.subr.mxu0 0.0
    %1401 = vmatpush1.msra.mxu0 0.0
    %1402 = vmatprep.subr.mxu0 0.0
    %1403 = vmatpush1.msra.mxu0 0.0
    %1404 = vmatprep.subr.mxu0 0.0
    %1405 = vmatpush1.msra.mxu0 0.0
    %1406 = vmatprep.subr.mxu0 0.0
    %1407 = vmatpush1.msra.mxu0 0.0
    %1408 = vmatprep.subr.mxu0 0.0
    %1409 = vmatpush1.msra.mxu0 0.0
    %1410 = vmatprep.subr.mxu0 0.0
    %1411 = vmatpush1.msra.mxu0 0.0
    %1412 = vmatprep.subr.mxu0 0.0
    %1413 = vmatpush1.msra.mxu0 0.0
    %1414 = vmatprep.subr.mxu0 0.0
    %1415 = vmatpush1.msra.mxu0 0.0
    %1416 = vmatprep.subr.mxu0 0.0
    %1417 = vmatpush1.msra.mxu0 0.0
    %1418 = vmatprep.subr.mxu0 0.0
    %1419 = vmatpush1.msra.mxu0 0.0
    %1420 = vmatprep.subr.mxu0 0.0
    %1421 = vmatpush1.msra.mxu0 0.0
    %1422 = vmatprep.subr.mxu0 0.0
    %1423 = vmatpush1.msra.mxu0 0.0
    %1424 = vmatprep.subr.mxu0 0.0
    %1425 = vmatpush1.msra.mxu0 0.0
    %1426 = vmatprep.subr.mxu0 0.0
    %1427 = vmatpush1.msra.mxu0 0.0
    %1428 = vmatprep.subr.mxu0 0.0
    %1429 = vmatpush1.msra.mxu0 0.0
    %1430 = vmatprep.mubr.f32.mxu0 0.0
    %1431 = vmatmul.mubr.f32.gmra.mrb[0].mxu0 %v1361
    %v1432 = vpop.f32.mrb[0].mxu0
    %v1433 = vadd.f32 0.0, %v1432
    %v1434 = vpop.f32.mrb[0].mxu0
    %1435 = vdwg.mxu0
    %v1444 = vrot.slane %v977, 7
    %vm1445 = vcmask 1041409
    %v1446 = vsel %vm1445, %v1444, %v901
    %v1447 = vrot.slane %v1053, 6
    %vm1448 = vcmask 1042434
    %v1449 = vsel %vm1448, %v1447, %v1446
    %v1450 = vrot.slane %v1129, 5
    %vm1451 = vcmask 1043459
    %v1452 = vsel %vm1451, %v1450, %v1449
    %v1453 = vrot.slane %v1205, 4
    %vm1454 = vcmask 1044484
    %v1455 = vsel %vm1454, %v1453, %v1452
    %v1456 = vrot.slane %v1281, 3
    %vm1457 = vcmask 1045509
    %v1458 = vsel %vm1457, %v1456, %v1455
    %v1459 = vrot.slane %v1357, 2
    %vm1460 = vcmask 1046534
    %v1461 = vsel %vm1460, %v1459, %v1458
    %v1462 = vrot.slane %v1433, 1
    %vm1463 = vcmask 1047559
    %v1464 = vsel %vm1463, %v1462, %v1461
    %v1466 = vrot.slane %v901, 1
    %v1467 = vsel %vm1445, %v977, %v1466
    %v1468 = vrot.slane %v1053, 7
    %v1469 = vsel %vm1448, %v1468, %v1467
    %v1470 = vrot.slane %v1129, 6
    %v1471 = vsel %vm1451, %v1470, %v1469
    %v1472 = vrot.slane %v1205, 5
    %v1473 = vsel %vm1454, %v1472, %v1471
    %v1474 = vrot.slane %v1281, 4
    %v1475 = vsel %vm1457, %v1474, %v1473
    %v1476 = vrot.slane %v1357, 3
    %v1477 = vsel %vm1460, %v1476, %v1475
    %v1478 = vrot.slane %v1433, 2
    %v1479 = vsel %vm1463, %v1478, %v1477
    %1480 = vrot.lane.b32.xlu0 %v1479, 4
    %v1481 = vpop.permute.xlu0 %1480
    %v1483 = vrot.slane %v901, 2
    %v1484 = vrot.slane %v977, 1
    %v1485 = vsel %vm1445, %v1484, %v1483
    %v1486 = vsel %vm1448, %v1053, %v1485
    %v1487 = vrot.slane %v1129, 7
    %v1488 = vsel %vm1451, %v1487, %v1486
    %v1489 = vrot.slane %v1205, 6
    %v1490 = vsel %vm1454, %v1489, %v1488
    %v1491 = vrot.slane %v1281, 5
    %v1492 = vsel %vm1457, %v1491, %v1490
    %v1493 = vrot.slane %v1357, 4
    %v1494 = vsel %vm1460, %v1493, %v1492
    %v1495 = vrot.slane %v1433, 3
    %v1496 = vsel %vm1463, %v1495, %v1494
    %1497 = vrot.lane.b32.xlu0 %v1496, 8
    %v1498 = vpop.permute.xlu0 %1497
    %v1500 = vrot.slane %v901, 3
    %v1501 = vrot.slane %v977, 2
    %v1502 = vsel %vm1445, %v1501, %v1500
    %v1503 = vrot.slane %v1053, 1
    %v1504 = vsel %vm1448, %v1503, %v1502
    %v1505 = vsel %vm1451, %v1129, %v1504
    %v1506 = vrot.slane %v1205, 7
    %v1507 = vsel %vm1454, %v1506, %v1505
    %v1508 = vrot.slane %v1281, 6
    %v1509 = vsel %vm1457, %v1508, %v1507
    %v1510 = vrot.slane %v1357, 5
    %v1511 = vsel %vm1460, %v1510, %v1509
    %v1512 = vrot.slane %v1433, 4
    %v1513 = vsel %vm1463, %v1512, %v1511
    %1514 = vrot.lane.b32.xlu0 %v1513, 12
    %v1515 = vpop.permute.xlu0 %1514
    %v1517 = vrot.slane %v901, 4
    %v1518 = vrot.slane %v977, 3
    %v1519 = vsel %vm1445, %v1518, %v1517
    %v1520 = vrot.slane %v1053, 2
    %v1521 = vsel %vm1448, %v1520, %v1519
    %v1522 = vrot.slane %v1129, 1
    %v1523 = vsel %vm1451, %v1522, %v1521
    %v1524 = vsel %vm1454, %v1205, %v1523
    %v1525 = vrot.slane %v1281, 7
    %v1526 = vsel %vm1457, %v1525, %v1524
    %v1527 = vrot.slane %v1357, 6
    %v1528 = vsel %vm1460, %v1527, %v1526
    %v1529 = vrot.slane %v1433, 5
    %v1530 = vsel %vm1463, %v1529, %v1528
    %1531 = vrot.lane.b32.xlu0 %v1530, 16
    %v1532 = vpop.permute.xlu0 %1531
    %v1534 = vrot.slane %v901, 5
    %v1535 = vrot.slane %v977, 4
    %v1536 = vsel %vm1445, %v1535, %v1534
    %v1537 = vrot.slane %v1053, 3
    %v1538 = vsel %vm1448, %v1537, %v1536
    %v1539 = vrot.slane %v1129, 2
    %v1540 = vsel %vm1451, %v1539, %v1538
    %v1541 = vrot.slane %v1205, 1
    %v1542 = vsel %vm1454, %v1541, %v1540
    %v1543 = vsel %vm1457, %v1281, %v1542
    %v1544 = vrot.slane %v1357, 7
    %v1545 = vsel %vm1460, %v1544, %v1543
    %v1546 = vrot.slane %v1433, 6
    %v1547 = vsel %vm1463, %v1546, %v1545
    %1548 = vrot.lane.b32.xlu0 %v1547, 20
    %v1549 = vpop.permute.xlu0 %1548
    %vm1551 = vcmask 31744
    %v1552 = vsel %vm1551, %v1464, %v1481
    %v1553 = vsel %vm136, %v1552, %v1498
    %v1554 = vsel %vm826, %v1553, %v1515
    %vm1555 = vcmask 130048
    %v1556 = vsel %vm1555, %v1554, %v1532
    %vm1557 = vcmask 162816
    %v1558 = vsel %vm1557, %v1556, %v1549
    %v1559 = vadd.f32 %v109, %v1558
    %vm1560 = vcmask 195584
    %1561 = vst.msk [vmem:[#allocation2] sm:$0xff] %vm1560, %v1559
    // Predicated region
    $region26: #{tpu_custom_call.1} parent=1 // pred_check
      _
    $region27: #{tpu_custom_call.1} parent=1 // pred_check_branch
      %1563 = sbr.rel (0) target = $region29
    $region28: #{tpu_custom_call.1} parent=1 // pred_region
      %s1565 = ssub.s32 128, 128
      %1566 = vsyncadd [#allocation3], %s1565
      %s1568 = sshll.u32 [#allocation2], 4
      %s1569 = int_to_ptr.vmem [resolvable:$true] %s1568
      %1571 = dma.vmem_to_hbm [thread:$0]  %s1569, 128, %s6, [#allocation3]
    $region29: #{tpu_custom_call.1} parent=1 // pred_fallthru
      _
    // Predicated region
    $region30: #{tpu_custom_call.1} parent=1 // pred_check
      _
    $region31: #{tpu_custom_call.1} parent=1 // pred_check_branch
      %1573 = sbr.rel (0) target = $region33
    $region32: #{tpu_custom_call.1} parent=1 // pred_region
      %1574 = dma.done [#allocation3], 128
    $region33: #{tpu_custom_call.1} parent=1 // pred_fallthru
      _
    %1575 = vsyncpa [#allocation3], 1

</llo_original>
